<compile_context>
chip_gen: v7x
topology: tpu7x:2x2x1
jax: 0.10.0
libtpu: 0.0.40
codegen_flags: <defaults>
</compile_context>

<pallas_src>
import jax
import jax.numpy as jnp
from jax import lax
from jax.experimental import pallas as pl
from jax.experimental.pallas import tpu as pltpu

TOPK = 9
CARRY_ROWS = 16  # TOPK padded to a sublane multiple; rows 9..15 stay -inf


def _round_up(x, m):
    return ((x + m - 1) // m) * m


def _knockout_top9(work):
    """Return the 9 per-round column maxima (list of (Tb,1,Td)) of `work` (axis 1).

    Each round extracts the current max per (batch, feature) column and knocks
    out exactly one occurrence (the first along axis 1), so duplicates are
    counted exactly like a descending sort followed by a [:9] slice.
    """
    tb, nrows, td = work.shape
    row_iota = lax.broadcasted_iota(jnp.int32, (tb, nrows, td), 1)
    maxes = []
    for _ in range(TOPK):
        m = jnp.max(work, axis=1, keepdims=True)              # (Tb, 1, Td)
        maxes.append(m)
        cand = jnp.where(work == m, row_iota, nrows)
        first_idx = jnp.min(cand, axis=1, keepdims=True)       # first occurrence
        work = jnp.where(row_iota == first_idx, -jnp.inf, work)
    return maxes


def _mean_of(maxes):
    total = maxes[0]
    for m in maxes[1:]:
        total = total + m
    return total[:, 0, :] * (1.0 / TOPK)                        # (Tb, Td)


def _single_chunk_kernel(x_ref, o_ref):
    # Whole N fits in one tile: no carry state, no scratch, single output store.
    vals = x_ref[...].astype(jnp.float32)                       # (Tb, Tn, Td)
    maxes = _knockout_top9(vals)
    o_ref[...] = _mean_of(maxes).astype(o_ref.dtype)


def _streaming_kernel(x_ref, o_ref, carry_ref):
    # x_ref: (Tb, Tn, Td) current N-chunk
    # o_ref: (Tb, Td)     output (written on last chunk only)
    # carry_ref: (Tb, 16, Td) f32 carried top-9 of all chunks seen so far
    ni = pl.program_id(2)
    last = pl.num_programs(2) - 1

    @pl.when(ni == 0)
    def _init():
        carry_ref[...] = jnp.full(carry_ref.shape, -jnp.inf, carry_ref.dtype)

    vals = x_ref[...].astype(jnp.float32)                       # (Tb, Tn, Td)
    # Union of this chunk and the carried top-9 (carry read before any write).
    work = jnp.concatenate([vals, carry_ref[...]], axis=1)      # (Tb, Tn+16, Td)
    maxes = _knockout_top9(work)

    @pl.when(ni < last)
    def _store_carry():
        for i in range(TOPK):
            carry_ref[:, i:i + 1, :] = maxes[i]

    @pl.when(ni == last)
    def _finalize():
        o_ref[...] = _mean_of(maxes).astype(o_ref.dtype)


def reduce_topk_mean(x, *, tb=8, tn=128, td=256):
    """x: (B, N, D) float array with N >= 9. Returns (B, D) = mean(top-9 along dim 1)."""
    B, N, D = x.shape
    assert N >= TOPK, "need at least 9 elements along dim 1"
    assert jnp.issubdtype(x.dtype, jnp.floating), "floating inputs only"

    # Tile sizes: tb, tn multiples of 8 (sublane), td multiple of 128 (lane).
    tb = min(_round_up(tb, 8), _round_up(B, 8))
    tn = min(_round_up(tn, 8), _round_up(N, 8))
    td = min(_round_up(td, 128), _round_up(D, 128))
    Bp = _round_up(B, tb)
    Np = _round_up(N, tn)
    Dp = _round_up(D, td)

    # Pad with -inf: padded N rows never enter the top-9 (>= 9 real rows);
    # padded B rows / D columns are computed but sliced off below.
    if (Bp, Np, Dp) != (B, N, D):
        x = jnp.pad(x, ((0, Bp - B), (0, Np - N), (0, Dp - D)),
                    constant_values=-jnp.inf)

    n_chunks = Np // tn
    grid = (Bp // tb, Dp // td, n_chunks)
    single = n_chunks == 1
    kernel = _single_chunk_kernel if single else _streaming_kernel
    scratch = [] if single else [pltpu.VMEM((tb, CARRY_ROWS, td), jnp.float32)]

    out = pl.pallas_call(
        kernel,
        out_shape=jax.ShapeDtypeStruct((Bp, Dp), x.dtype),
        grid_spec=pltpu.PrefetchScalarGridSpec(
            num_scalar_prefetch=0,
            grid=grid,
            in_specs=[pl.BlockSpec((tb, tn, td), lambda bi, di, ni: (bi, ni, di))],
            out_specs=pl.BlockSpec((tb, td), lambda bi, di, ni: (bi, di)),
            scratch_shapes=scratch,
        ),
        compiler_params=pltpu.CompilerParams(
            dimension_semantics=("parallel", "parallel", "arbitrary"),
            vmem_limit_bytes=32 * 1024 * 1024,
        ),
    )(x)
    return out[:B, :D]


def reduce_topk_mean_ref(x):
    # pure-JAX reference: sort descending along axis 1, take top 9, mean
    s = -jnp.sort(-x, axis=1)
    return jnp.mean(s[:, :TOPK, :], axis=1)


if __name__ == "__main__":
    root = jax.random.PRNGKey(0)
    k1, k2, k3 = jax.random.split(root, 3)

    # Test 1: small module-like shape -> single-chunk kernel, padded B/D tiles.
    B, N, D = 2, 16, 32
    x = jax.random.normal(k1, (B, N, D), dtype=jnp.float32)
    out = jax.block_until_ready(reduce_topk_mean(x))
    ref = jax.block_until_ready(reduce_topk_mean_ref(x))
    assert out.shape == (B, D)
    assert jnp.allclose(out, ref, atol=1e-5, rtol=1e-5), "test1 mismatch"

    # Test 2: streaming-N carry path (tn=8 -> 3 chunks) plus padding on every
    # axis (B=3->8, N=21->24, D=40->128).
    x2 = jax.random.normal(k2, (3, 21, 40), dtype=jnp.float32)
    out2 = jax.block_until_ready(reduce_topk_mean(x2, tn=8))
    ref2 = jax.block_until_ready(reduce_topk_mean_ref(x2))
    assert out2.shape == (3, 40)
    assert jnp.allclose(out2, ref2, atol=1e-5, rtol=1e-5), "test2 mismatch"

    # Test 3: heavy duplicates (tie handling) across chunks.
    x3 = jnp.round(jax.random.normal(k3, (2, 32, 32), dtype=jnp.float32) * 2.0)
    out3 = jax.block_until_ready(reduce_topk_mean(x3, tn=8))
    ref3 = jax.block_until_ready(reduce_topk_mean_ref(x3))
    assert jnp.allclose(out3, ref3, atol=1e-5, rtol=1e-5), "test3 mismatch"

    print("KERNEL_OK")
</pallas_src>

<mosaic_0001>
module attributes {stable_mosaic.version = 11 : i64} {
  func.func @_single_chunk_kernel(%arg0: i32, %arg1: i32, %arg2: i32, %arg3: memref<8x16x128xf32, #tpu.memory_space<vmem>>, %arg4: memref<8x128xf32, #tpu.memory_space<vmem>>) attributes {dimension_semantics = [#tpu.dimension_semantics<parallel>, #tpu.dimension_semantics<parallel>, #tpu.dimension_semantics<arbitrary>], iteration_bounds = array<i64: 1, 1, 1>, scalar_prefetch = 0 : i64, scratch_operands = 0 : i64, tpu.core_type = #tpu.core_type<tc>, window_params = [{transform_indices = @transform_0, window_bounds = array<i64: 8, 16, 128>}, {transform_indices = @transform_1, window_bounds = array<i64: 8, 128>}]} {
    %c0 = arith.constant 0 : index
    %c0_0 = arith.constant 0 : index
    %c0_1 = arith.constant 0 : index
    %0 = vector.load %arg3[%c0, %c0_0, %c0_1] : memref<8x16x128xf32, #tpu.memory_space<vmem>>, vector<8x16x128xf32>
    %1 = tpu.iota {dimensions = array<i32: 1>} : vector<8x16x128xi32>
    %cst = arith.constant dense<0xFF800000> : vector<8x128xf32>
    %2 = vector.multi_reduction <maximumf>, %0, %cst [1] : vector<8x16x128xf32> to vector<8x128xf32>
    %3 = vector.shape_cast %2 : vector<8x128xf32> to vector<8x1x128xf32>
    %4 = vector.broadcast %3 : vector<8x1x128xf32> to vector<8x16x128xf32>
    %5 = arith.cmpf oeq, %0, %4 : vector<8x16x128xf32>
    %c16_i32 = arith.constant 16 : i32
    %6 = vector.broadcast %c16_i32 : i32 to vector<8x16x128xi32>
    %7 = arith.select %5, %1, %6 : vector<8x16x128xi1>, vector<8x16x128xi32>
    %cst_2 = arith.constant dense<2147483647> : vector<8x128xi32>
    %8 = vector.multi_reduction <minsi>, %7, %cst_2 [1] : vector<8x16x128xi32> to vector<8x128xi32>
    %9 = vector.shape_cast %8 : vector<8x128xi32> to vector<8x1x128xi32>
    %10 = vector.broadcast %9 : vector<8x1x128xi32> to vector<8x16x128xi32>
    %11 = arith.cmpi eq, %1, %10 : vector<8x16x128xi32>
    %cst_3 = arith.constant 0xFF800000 : f32
    %12 = vector.broadcast %cst_3 : f32 to vector<8x16x128xf32>
    %13 = arith.select %11, %12, %0 : vector<8x16x128xi1>, vector<8x16x128xf32>
    %cst_4 = arith.constant dense<0xFF800000> : vector<8x128xf32>
    %14 = vector.multi_reduction <maximumf>, %13, %cst_4 [1] : vector<8x16x128xf32> to vector<8x128xf32>
    %15 = vector.shape_cast %14 : vector<8x128xf32> to vector<8x1x128xf32>
    %16 = vector.broadcast %15 : vector<8x1x128xf32> to vector<8x16x128xf32>
    %17 = arith.cmpf oeq, %13, %16 : vector<8x16x128xf32>
    %c16_i32_5 = arith.constant 16 : i32
    %18 = vector.broadcast %c16_i32_5 : i32 to vector<8x16x128xi32>
    %19 = arith.select %17, %1, %18 : vector<8x16x128xi1>, vector<8x16x128xi32>
    %cst_6 = arith.constant dense<2147483647> : vector<8x128xi32>
    %20 = vector.multi_reduction <minsi>, %19, %cst_6 [1] : vector<8x16x128xi32> to vector<8x128xi32>
    %21 = vector.shape_cast %20 : vector<8x128xi32> to vector<8x1x128xi32>
    %22 = vector.broadcast %21 : vector<8x1x128xi32> to vector<8x16x128xi32>
    %23 = arith.cmpi eq, %1, %22 : vector<8x16x128xi32>
    %cst_7 = arith.constant 0xFF800000 : f32
    %24 = vector.broadcast %cst_7 : f32 to vector<8x16x128xf32>
    %25 = arith.select %23, %24, %13 : vector<8x16x128xi1>, vector<8x16x128xf32>
    %cst_8 = arith.constant dense<0xFF800000> : vector<8x128xf32>
    %26 = vector.multi_reduction <maximumf>, %25, %cst_8 [1] : vector<8x16x128xf32> to vector<8x128xf32>
    %27 = vector.shape_cast %26 : vector<8x128xf32> to vector<8x1x128xf32>
    %28 = vector.broadcast %27 : vector<8x1x128xf32> to vector<8x16x128xf32>
    %29 = arith.cmpf oeq, %25, %28 : vector<8x16x128xf32>
    %c16_i32_9 = arith.constant 16 : i32
    %30 = vector.broadcast %c16_i32_9 : i32 to vector<8x16x128xi32>
    %31 = arith.select %29, %1, %30 : vector<8x16x128xi1>, vector<8x16x128xi32>
    %cst_10 = arith.constant dense<2147483647> : vector<8x128xi32>
    %32 = vector.multi_reduction <minsi>, %31, %cst_10 [1] : vector<8x16x128xi32> to vector<8x128xi32>
    %33 = vector.shape_cast %32 : vector<8x128xi32> to vector<8x1x128xi32>
    %34 = vector.broadcast %33 : vector<8x1x128xi32> to vector<8x16x128xi32>
    %35 = arith.cmpi eq, %1, %34 : vector<8x16x128xi32>
    %cst_11 = arith.constant 0xFF800000 : f32
    %36 = vector.broadcast %cst_11 : f32 to vector<8x16x128xf32>
    %37 = arith.select %35, %36, %25 : vector<8x16x128xi1>, vector<8x16x128xf32>
    %cst_12 = arith.constant dense<0xFF800000> : vector<8x128xf32>
    %38 = vector.multi_reduction <maximumf>, %37, %cst_12 [1] : vector<8x16x128xf32> to vector<8x128xf32>
    %39 = vector.shape_cast %38 : vector<8x128xf32> to vector<8x1x128xf32>
    %40 = vector.broadcast %39 : vector<8x1x128xf32> to vector<8x16x128xf32>
    %41 = arith.cmpf oeq, %37, %40 : vector<8x16x128xf32>
    %c16_i32_13 = arith.constant 16 : i32
    %42 = vector.broadcast %c16_i32_13 : i32 to vector<8x16x128xi32>
    %43 = arith.select %41, %1, %42 : vector<8x16x128xi1>, vector<8x16x128xi32>
    %cst_14 = arith.constant dense<2147483647> : vector<8x128xi32>
    %44 = vector.multi_reduction <minsi>, %43, %cst_14 [1] : vector<8x16x128xi32> to vector<8x128xi32>
    %45 = vector.shape_cast %44 : vector<8x128xi32> to vector<8x1x128xi32>
    %46 = vector.broadcast %45 : vector<8x1x128xi32> to vector<8x16x128xi32>
    %47 = arith.cmpi eq, %1, %46 : vector<8x16x128xi32>
    %cst_15 = arith.constant 0xFF800000 : f32
    %48 = vector.broadcast %cst_15 : f32 to vector<8x16x128xf32>
    %49 = arith.select %47, %48, %37 : vector<8x16x128xi1>, vector<8x16x128xf32>
    %cst_16 = arith.constant dense<0xFF800000> : vector<8x128xf32>
    %50 = vector.multi_reduction <maximumf>, %49, %cst_16 [1] : vector<8x16x128xf32> to vector<8x128xf32>
    %51 = vector.shape_cast %50 : vector<8x128xf32> to vector<8x1x128xf32>
    %52 = vector.broadcast %51 : vector<8x1x128xf32> to vector<8x16x128xf32>
    %53 = arith.cmpf oeq, %49, %52 : vector<8x16x128xf32>
    %c16_i32_17 = arith.constant 16 : i32
    %54 = vector.broadcast %c16_i32_17 : i32 to vector<8x16x128xi32>
    %55 = arith.select %53, %1, %54 : vector<8x16x128xi1>, vector<8x16x128xi32>
    %cst_18 = arith.constant dense<2147483647> : vector<8x128xi32>
    %56 = vector.multi_reduction <minsi>, %55, %cst_18 [1] : vector<8x16x128xi32> to vector<8x128xi32>
    %57 = vector.shape_cast %56 : vector<8x128xi32> to vector<8x1x128xi32>
    %58 = vector.broadcast %57 : vector<8x1x128xi32> to vector<8x16x128xi32>
    %59 = arith.cmpi eq, %1, %58 : vector<8x16x128xi32>
    %cst_19 = arith.constant 0xFF800000 : f32
    %60 = vector.broadcast %cst_19 : f32 to vector<8x16x128xf32>
    %61 = arith.select %59, %60, %49 : vector<8x16x128xi1>, vector<8x16x128xf32>
    %cst_20 = arith.constant dense<0xFF800000> : vector<8x128xf32>
    %62 = vector.multi_reduction <maximumf>, %61, %cst_20 [1] : vector<8x16x128xf32> to vector<8x128xf32>
    %63 = vector.shape_cast %62 : vector<8x128xf32> to vector<8x1x128xf32>
    %64 = vector.broadcast %63 : vector<8x1x128xf32> to vector<8x16x128xf32>
    %65 = arith.cmpf oeq, %61, %64 : vector<8x16x128xf32>
    %c16_i32_21 = arith.constant 16 : i32
    %66 = vector.broadcast %c16_i32_21 : i32 to vector<8x16x128xi32>
    %67 = arith.select %65, %1, %66 : vector<8x16x128xi1>, vector<8x16x128xi32>
    %cst_22 = arith.constant dense<2147483647> : vector<8x128xi32>
    %68 = vector.multi_reduction <minsi>, %67, %cst_22 [1] : vector<8x16x128xi32> to vector<8x128xi32>
    %69 = vector.shape_cast %68 : vector<8x128xi32> to vector<8x1x128xi32>
    %70 = vector.broadcast %69 : vector<8x1x128xi32> to vector<8x16x128xi32>
    %71 = arith.cmpi eq, %1, %70 : vector<8x16x128xi32>
    %cst_23 = arith.constant 0xFF800000 : f32
    %72 = vector.broadcast %cst_23 : f32 to vector<8x16x128xf32>
    %73 = arith.select %71, %72, %61 : vector<8x16x128xi1>, vector<8x16x128xf32>
    %cst_24 = arith.constant dense<0xFF800000> : vector<8x128xf32>
    %74 = vector.multi_reduction <maximumf>, %73, %cst_24 [1] : vector<8x16x128xf32> to vector<8x128xf32>
    %75 = vector.shape_cast %74 : vector<8x128xf32> to vector<8x1x128xf32>
    %76 = vector.broadcast %75 : vector<8x1x128xf32> to vector<8x16x128xf32>
    %77 = arith.cmpf oeq, %73, %76 : vector<8x16x128xf32>
    %c16_i32_25 = arith.constant 16 : i32
    %78 = vector.broadcast %c16_i32_25 : i32 to vector<8x16x128xi32>
    %79 = arith.select %77, %1, %78 : vector<8x16x128xi1>, vector<8x16x128xi32>
    %cst_26 = arith.constant dense<2147483647> : vector<8x128xi32>
    %80 = vector.multi_reduction <minsi>, %79, %cst_26 [1] : vector<8x16x128xi32> to vector<8x128xi32>
    %81 = vector.shape_cast %80 : vector<8x128xi32> to vector<8x1x128xi32>
    %82 = vector.broadcast %81 : vector<8x1x128xi32> to vector<8x16x128xi32>
    %83 = arith.cmpi eq, %1, %82 : vector<8x16x128xi32>
    %cst_27 = arith.constant 0xFF800000 : f32
    %84 = vector.broadcast %cst_27 : f32 to vector<8x16x128xf32>
    %85 = arith.select %83, %84, %73 : vector<8x16x128xi1>, vector<8x16x128xf32>
    %cst_28 = arith.constant dense<0xFF800000> : vector<8x128xf32>
    %86 = vector.multi_reduction <maximumf>, %85, %cst_28 [1] : vector<8x16x128xf32> to vector<8x128xf32>
    %87 = vector.shape_cast %86 : vector<8x128xf32> to vector<8x1x128xf32>
    %88 = vector.broadcast %87 : vector<8x1x128xf32> to vector<8x16x128xf32>
    %89 = arith.cmpf oeq, %85, %88 : vector<8x16x128xf32>
    %c16_i32_29 = arith.constant 16 : i32
    %90 = vector.broadcast %c16_i32_29 : i32 to vector<8x16x128xi32>
    %91 = arith.select %89, %1, %90 : vector<8x16x128xi1>, vector<8x16x128xi32>
    %cst_30 = arith.constant dense<2147483647> : vector<8x128xi32>
    %92 = vector.multi_reduction <minsi>, %91, %cst_30 [1] : vector<8x16x128xi32> to vector<8x128xi32>
    %93 = vector.shape_cast %92 : vector<8x128xi32> to vector<8x1x128xi32>
    %94 = vector.broadcast %93 : vector<8x1x128xi32> to vector<8x16x128xi32>
    %95 = arith.cmpi eq, %1, %94 : vector<8x16x128xi32>
    %cst_31 = arith.constant 0xFF800000 : f32
    %96 = vector.broadcast %cst_31 : f32 to vector<8x16x128xf32>
    %97 = arith.select %95, %96, %85 : vector<8x16x128xi1>, vector<8x16x128xf32>
    %cst_32 = arith.constant dense<0xFF800000> : vector<8x128xf32>
    %98 = vector.multi_reduction <maximumf>, %97, %cst_32 [1] : vector<8x16x128xf32> to vector<8x128xf32>
    %99 = vector.shape_cast %98 : vector<8x128xf32> to vector<8x1x128xf32>
    %100 = arith.addf %3, %15 : vector<8x1x128xf32>
    %101 = arith.addf %100, %27 : vector<8x1x128xf32>
    %102 = arith.addf %101, %39 : vector<8x1x128xf32>
    %103 = arith.addf %102, %51 : vector<8x1x128xf32>
    %104 = arith.addf %103, %63 : vector<8x1x128xf32>
    %105 = arith.addf %104, %75 : vector<8x1x128xf32>
    %106 = arith.addf %105, %87 : vector<8x1x128xf32>
    %107 = arith.addf %106, %99 : vector<8x1x128xf32>
    %108 = vector.shape_cast %107 : vector<8x1x128xf32> to vector<8x128xf32>
    %cst_33 = arith.constant 0.111111112 : f32
    %109 = vector.broadcast %cst_33 : f32 to vector<8x128xf32>
    %110 = arith.mulf %108, %109 : vector<8x128xf32>
    %c0_34 = arith.constant 0 : index
    %c0_35 = arith.constant 0 : index
    %111 = vector.load %arg4[%c0_34, %c0_35] : memref<8x128xf32, #tpu.memory_space<vmem>>, vector<8x128xf32>
    tpu.vector_store %arg4[%c0_34, %c0_35], %110 {strides = array<i32>} : memref<8x128xf32, #tpu.memory_space<vmem>>, vector<8x128xf32>,
    return
  }
  func.func @transform_0(%arg0: i32, %arg1: i32, %arg2: i32) -> (i32, i32, i32) {
    %c0_i32 = arith.constant 0 : i32
    return %arg0, %arg2, %arg1 : i32, i32, i32
  }
  func.func @transform_1(%arg0: i32, %arg1: i32, %arg2: i32) -> (i32, i32) {
    %c0_i32 = arith.constant 0 : i32
    return %arg0, %arg1 : i32, i32
  }
}

</mosaic_0001>

<llo_original>
// kernel: tpu_custom_call.1
$region0: #{tpu_custom_call.1}
  #allocation0 [shape = 'u32[]', space=smem, size = 0x4, offset = 0x4, fixed_abs, tag = 'smem constant byte address 0x4 - core index']
  #allocation1 [shape = 'u32[144,128]{1,0:T(1,128)}', space=vmem, size = 0x12000, scoped, tag = 'internal scratch']
  %s0 = inlined_call_operand.hbm [shape: f32[8,16,128], index: 0, kind: input, shape index: {}]
  %s1 = inlined_call_operand.hbm [shape: f32[8,128], index: 1, kind: output, shape index: {}]
  %s2 = sld [smem:[#allocation0]]
  $region18: #{tpu_custom_call.1} parent=0
    _
  %s4 = ssub.s32 1, %s2
  %s5 = scalar_select 0, %s4, %s2
  $region1: #{tpu_custom_call.1} parent=0
    #allocation2 [shape = 'u8[65536]{0}', space=vmem, size = 0x10000, scoped, tag = 'input window, operand 0, single buffered']
    #allocation3 [shape = 's32[1]{0}', space=sflag, size = 0x4, scoped, tag = 'scoped memory for tpu_custom_call.1']
    #allocation4 [shape = 's32[1]{0}', space=sflag, size = 0x4, scoped, tag = 'scoped memory for tpu_custom_call.1']
    #allocation5 [shape = 'u8[4096]{0}', space=vmem, size = 0x1000, scoped, tag = 'output window, operand 0, single buffered']
    %6 = vsyncpa [#allocation3], 0
    %7 = vsyncpa [#allocation4], 0
    // Predicated region
    $region2: #{tpu_custom_call.1} parent=1 // pred_check
      _
    $region3: #{tpu_custom_call.1} parent=1 // pred_check_branch
      %9 = sbr.rel (0) target = $region5
    $region4: #{tpu_custom_call.1} parent=1 // pred_region
      %s11 = ssub.s32 2048, 2048
      %12 = vsyncadd [#allocation3], %s11
      %s13 = sshll.u32 [#allocation2], 4
      %s14 = int_to_ptr.vmem [resolvable:$true] %s13
      %19 = dma.hbm_to_vmem [thread:$0]  %s0, 2048, %s14, [#allocation3], 128, 128, 8
    $region5: #{tpu_custom_call.1} parent=1 // pred_fallthru
      _
    // Predicated region
    $region6: #{tpu_custom_call.1} parent=1 // pred_check
      _
    $region7: #{tpu_custom_call.1} parent=1 // pred_check_branch
      %21 = sbr.rel (0) target = $region9
    $region8: #{tpu_custom_call.1} parent=1 // pred_region
      %22 = dma.done [#allocation3], 2048
    $region9: #{tpu_custom_call.1} parent=1 // pred_fallthru
      _
    %v23 = vld [vmem:[#allocation2] sm:$0xff]
    %v24 = vld [vmem:[#allocation2 + $0x8] sm:$0xff]
    %v25 = vld [vmem:[#allocation2 + $0x10] sm:$0xff]
    %v26 = vld [vmem:[#allocation2 + $0x18] sm:$0xff]
    %v27 = vld [vmem:[#allocation2 + $0x20] sm:$0xff]
    %v28 = vld [vmem:[#allocation2 + $0x28] sm:$0xff]
    %v29 = vld [vmem:[#allocation2 + $0x30] sm:$0xff]
    %v30 = vld [vmem:[#allocation2 + $0x38] sm:$0xff]
    %v31 = vld [vmem:[#allocation2 + $0x40] sm:$0xff]
    %v32 = vld [vmem:[#allocation2 + $0x48] sm:$0xff]
    %v33 = vld [vmem:[#allocation2 + $0x50] sm:$0xff]
    %v34 = vld [vmem:[#allocation2 + $0x58] sm:$0xff]
    %v35 = vld [vmem:[#allocation2 + $0x60] sm:$0xff]
    %v36 = vld [vmem:[#allocation2 + $0x68] sm:$0xff]
    %v37 = vld [vmem:[#allocation2 + $0x70] sm:$0xff]
    %v38 = vld [vmem:[#allocation2 + $0x78] sm:$0xff]
    %v39 = vlaneseq
    %v40 = vshrl.u32 %v39, 7
    %v41 = vadd.s32 %v40, 8
    %v42 = vmax.f32 %v23, %v24
    %v43 = vrot.slane %v42, 4
    %v44 = vmax.f32 %v42, %v43
    %v45 = vrot.slane %v44, 2
    %v46 = vmax.f32 %v44, %v45
    %v47 = vrot.slane %v46, 1
    %v48 = vmax.f32 %v46, %v47
    %v49 = vmax.f32 %v25, %v26
    %v50 = vrot.slane %v49, 4
    %v51 = vmax.f32 %v49, %v50
    %v52 = vrot.slane %v51, 2
    %v53 = vmax.f32 %v51, %v52
    %v54 = vrot.slane %v53, 1
    %v55 = vmax.f32 %v53, %v54
    %v56 = vmax.f32 %v27, %v28
    %v57 = vrot.slane %v56, 4
    %v58 = vmax.f32 %v56, %v57
    %v59 = vrot.slane %v58, 2
    %v60 = vmax.f32 %v58, %v59
    %v61 = vrot.slane %v60, 1
    %v62 = vmax.f32 %v60, %v61
    %v63 = vmax.f32 %v29, %v30
    %v64 = vrot.slane %v63, 4
    %v65 = vmax.f32 %v63, %v64
    %v66 = vrot.slane %v65, 2
    %v67 = vmax.f32 %v65, %v66
    %v68 = vrot.slane %v67, 1
    %v69 = vmax.f32 %v67, %v68
    %v70 = vmax.f32 %v31, %v32
    %v71 = vrot.slane %v70, 4
    %v72 = vmax.f32 %v70, %v71
    %v73 = vrot.slane %v72, 2
    %v74 = vmax.f32 %v72, %v73
    %v75 = vrot.slane %v74, 1
    %v76 = vmax.f32 %v74, %v75
    %v77 = vmax.f32 %v33, %v34
    %v78 = vrot.slane %v77, 4
    %v79 = vmax.f32 %v77, %v78
    %v80 = vrot.slane %v79, 2
    %v81 = vmax.f32 %v79, %v80
    %v82 = vrot.slane %v81, 1
    %v83 = vmax.f32 %v81, %v82
    %v84 = vmax.f32 %v35, %v36
    %v85 = vrot.slane %v84, 4
    %v86 = vmax.f32 %v84, %v85
    %v87 = vrot.slane %v86, 2
    %v88 = vmax.f32 %v86, %v87
    %v89 = vrot.slane %v88, 1
    %v90 = vmax.f32 %v88, %v89
    %v91 = vmax.f32 %v37, %v38
    %v92 = vrot.slane %v91, 4
    %v93 = vmax.f32 %v91, %v92
    %v94 = vrot.slane %v93, 2
    %v95 = vmax.f32 %v93, %v94
    %v96 = vrot.slane %v95, 1
    %v97 = vmax.f32 %v95, %v96
    %vm98 = vcmp.eq.f32.partialorder %v23, %v48
    %vm99 = vcmp.eq.f32.partialorder %v24, %v48
    %vm100 = vcmp.eq.f32.partialorder %v25, %v55
    %vm101 = vcmp.eq.f32.partialorder %v26, %v55
    %vm102 = vcmp.eq.f32.partialorder %v27, %v62
    %vm103 = vcmp.eq.f32.partialorder %v28, %v62
    %vm104 = vcmp.eq.f32.partialorder %v29, %v69
    %vm105 = vcmp.eq.f32.partialorder %v30, %v69
    %vm106 = vcmp.eq.f32.partialorder %v31, %v76
    %vm107 = vcmp.eq.f32.partialorder %v32, %v76
    %vm108 = vcmp.eq.f32.partialorder %v33, %v83
    %vm109 = vcmp.eq.f32.partialorder %v34, %v83
    %vm110 = vcmp.eq.f32.partialorder %v35, %v90
    %vm111 = vcmp.eq.f32.partialorder %v36, %v90
    %vm112 = vcmp.eq.f32.partialorder %v37, %v97
    %vm113 = vcmp.eq.f32.partialorder %v38, %v97
    %v114 = vsel %vm98, %v40, 16
    %v115 = vsel %vm99, %v41, 16
    %v116 = vsel %vm100, %v40, 16
    %v117 = vsel %vm101, %v41, 16
    %v118 = vsel %vm102, %v40, 16
    %v119 = vsel %vm103, %v41, 16
    %v120 = vsel %vm104, %v40, 16
    %v121 = vsel %vm105, %v41, 16
    %v122 = vsel %vm106, %v40, 16
    %v123 = vsel %vm107, %v41, 16
    %v124 = vsel %vm108, %v40, 16
    %v125 = vsel %vm109, %v41, 16
    %v126 = vsel %vm110, %v40, 16
    %v127 = vsel %vm111, %v41, 16
    %v128 = vsel %vm112, %v40, 16
    %v129 = vsel %vm113, %v41, 16
    %vm130 = vcmp.lt.s32.totalorder %v114, %v115
    %v131 = vsel %vm130, %v114, %v115
    %v132 = vrot.slane %v131, 4
    %vm133 = vcmp.lt.s32.totalorder %v131, %v132
    %v134 = vsel %vm133, %v131, %v132
    %v135 = vrot.slane %v134, 2
    %vm136 = vcmp.lt.s32.totalorder %v134, %v135
    %v137 = vsel %vm136, %v134, %v135
    %v138 = vrot.slane %v137, 1
    %vm139 = vcmp.lt.s32.totalorder %v137, %v138
    %v140 = vsel %vm139, %v137, %v138
    %vm141 = vcmp.lt.s32.totalorder %v116, %v117
    %v142 = vsel %vm141, %v116, %v117
    %v143 = vrot.slane %v142, 4
    %vm144 = vcmp.lt.s32.totalorder %v142, %v143
    %v145 = vsel %vm144, %v142, %v143
    %v146 = vrot.slane %v145, 2
    %vm147 = vcmp.lt.s32.totalorder %v145, %v146
    %v148 = vsel %vm147, %v145, %v146
    %v149 = vrot.slane %v148, 1
    %vm150 = vcmp.lt.s32.totalorder %v148, %v149
    %v151 = vsel %vm150, %v148, %v149
    %vm152 = vcmp.lt.s32.totalorder %v118, %v119
    %v153 = vsel %vm152, %v118, %v119
    %v154 = vrot.slane %v153, 4
    %vm155 = vcmp.lt.s32.totalorder %v153, %v154
    %v156 = vsel %vm155, %v153, %v154
    %v157 = vrot.slane %v156, 2
    %vm158 = vcmp.lt.s32.totalorder %v156, %v157
    %v159 = vsel %vm158, %v156, %v157
    %v160 = vrot.slane %v159, 1
    %vm161 = vcmp.lt.s32.totalorder %v159, %v160
    %v162 = vsel %vm161, %v159, %v160
    %vm163 = vcmp.lt.s32.totalorder %v120, %v121
    %v164 = vsel %vm163, %v120, %v121
    %v165 = vrot.slane %v164, 4
    %vm166 = vcmp.lt.s32.totalorder %v164, %v165
    %v167 = vsel %vm166, %v164, %v165
    %v168 = vrot.slane %v167, 2
    %vm169 = vcmp.lt.s32.totalorder %v167, %v168
    %v170 = vsel %vm169, %v167, %v168
    %v171 = vrot.slane %v170, 1
    %vm172 = vcmp.lt.s32.totalorder %v170, %v171
    %v173 = vsel %vm172, %v170, %v171
    %vm174 = vcmp.lt.s32.totalorder %v122, %v123
    %v175 = vsel %vm174, %v122, %v123
    %v176 = vrot.slane %v175, 4
    %vm177 = vcmp.lt.s32.totalorder %v175, %v176
    %v178 = vsel %vm177, %v175, %v176
    %v179 = vrot.slane %v178, 2
    %vm180 = vcmp.lt.s32.totalorder %v178, %v179
    %v181 = vsel %vm180, %v178, %v179
    %v182 = vrot.slane %v181, 1
    %vm183 = vcmp.lt.s32.totalorder %v181, %v182
    %v184 = vsel %vm183, %v181, %v182
    %vm185 = vcmp.lt.s32.totalorder %v124, %v125
    %v186 = vsel %vm185, %v124, %v125
    %v187 = vrot.slane %v186, 4
    %vm188 = vcmp.lt.s32.totalorder %v186, %v187
    %v189 = vsel %vm188, %v186, %v187
    %v190 = vrot.slane %v189, 2
    %vm191 = vcmp.lt.s32.totalorder %v189, %v190
    %v192 = vsel %vm191, %v189, %v190
    %v193 = vrot.slane %v192, 1
    %vm194 = vcmp.lt.s32.totalorder %v192, %v193
    %v195 = vsel %vm194, %v192, %v193
    %vm196 = vcmp.lt.s32.totalorder %v126, %v127
    %v197 = vsel %vm196, %v126, %v127
    %v198 = vrot.slane %v197, 4
    %vm199 = vcmp.lt.s32.totalorder %v197, %v198
    %v200 = vsel %vm199, %v197, %v198
    %v201 = vrot.slane %v200, 2
    %vm202 = vcmp.lt.s32.totalorder %v200, %v201
    %v203 = vsel %vm202, %v200, %v201
    %v204 = vrot.slane %v203, 1
    %vm205 = vcmp.lt.s32.totalorder %v203, %v204
    %v206 = vsel %vm205, %v203, %v204
    %vm207 = vcmp.lt.s32.totalorder %v128, %v129
    %v208 = vsel %vm207, %v128, %v129
    %v209 = vrot.slane %v208, 4
    %vm210 = vcmp.lt.s32.totalorder %v208, %v209
    %v211 = vsel %vm210, %v208, %v209
    %v212 = vrot.slane %v211, 2
    %vm213 = vcmp.lt.s32.totalorder %v211, %v212
    %v214 = vsel %vm213, %v211, %v212
    %v215 = vrot.slane %v214, 1
    %vm216 = vcmp.lt.s32.totalorder %v214, %v215
    %v217 = vsel %vm216, %v214, %v215
    %vm218 = vcmp.eq.s32.totalorder %v40, %v140
    %vm219 = vcmp.eq.s32.totalorder %v41, %v140
    %vm220 = vcmp.eq.s32.totalorder %v40, %v151
    %vm221 = vcmp.eq.s32.totalorder %v41, %v151
    %vm222 = vcmp.eq.s32.totalorder %v40, %v162
    %vm223 = vcmp.eq.s32.totalorder %v41, %v162
    %vm224 = vcmp.eq.s32.totalorder %v40, %v173
    %vm225 = vcmp.eq.s32.totalorder %v41, %v173
    %vm226 = vcmp.eq.s32.totalorder %v40, %v184
    %vm227 = vcmp.eq.s32.totalorder %v41, %v184
    %vm228 = vcmp.eq.s32.totalorder %v40, %v195
    %vm229 = vcmp.eq.s32.totalorder %v41, %v195
    %vm230 = vcmp.eq.s32.totalorder %v40, %v206
    %vm231 = vcmp.eq.s32.totalorder %v41, %v206
    %vm232 = vcmp.eq.s32.totalorder %v40, %v217
    %vm233 = vcmp.eq.s32.totalorder %v41, %v217
    %v234 = vsel %vm218, -inf, %v23
    %v235 = vsel %vm219, -inf, %v24
    %v236 = vsel %vm220, -inf, %v25
    %v237 = vsel %vm221, -inf, %v26
    %v238 = vsel %vm222, -inf, %v27
    %v239 = vsel %vm223, -inf, %v28
    %v240 = vsel %vm224, -inf, %v29
    %v241 = vsel %vm225, -inf, %v30
    %v242 = vsel %vm226, -inf, %v31
    %v243 = vsel %vm227, -inf, %v32
    %v244 = vsel %vm228, -inf, %v33
    %v245 = vsel %vm229, -inf, %v34
    %v246 = vsel %vm230, -inf, %v35
    %v247 = vsel %vm231, -inf, %v36
    %v248 = vsel %vm232, -inf, %v37
    %v249 = vsel %vm233, -inf, %v38
    %v250 = vmax.f32 %v234, %v235
    %v251 = vrot.slane %v250, 4
    %v252 = vmax.f32 %v250, %v251
    %v253 = vrot.slane %v252, 2
    %v254 = vmax.f32 %v252, %v253
    %v255 = vrot.slane %v254, 1
    %v256 = vmax.f32 %v254, %v255
    %v257 = vmax.f32 %v236, %v237
    %v258 = vrot.slane %v257, 4
    %v259 = vmax.f32 %v257, %v258
    %v260 = vrot.slane %v259, 2
    %v261 = vmax.f32 %v259, %v260
    %v262 = vrot.slane %v261, 1
    %v263 = vmax.f32 %v261, %v262
    %v264 = vmax.f32 %v238, %v239
    %v265 = vrot.slane %v264, 4
    %v266 = vmax.f32 %v264, %v265
    %v267 = vrot.slane %v266, 2
    %v268 = vmax.f32 %v266, %v267
    %v269 = vrot.slane %v268, 1
    %v270 = vmax.f32 %v268, %v269
    %v271 = vmax.f32 %v240, %v241
    %v272 = vrot.slane %v271, 4
    %v273 = vmax.f32 %v271, %v272
    %v274 = vrot.slane %v273, 2
    %v275 = vmax.f32 %v273, %v274
    %v276 = vrot.slane %v275, 1
    %v277 = vmax.f32 %v275, %v276
    %v278 = vmax.f32 %v242, %v243
    %v279 = vrot.slane %v278, 4
    %v280 = vmax.f32 %v278, %v279
    %v281 = vrot.slane %v280, 2
    %v282 = vmax.f32 %v280, %v281
    %v283 = vrot.slane %v282, 1
    %v284 = vmax.f32 %v282, %v283
    %v285 = vmax.f32 %v244, %v245
    %v286 = vrot.slane %v285, 4
    %v287 = vmax.f32 %v285, %v286
    %v288 = vrot.slane %v287, 2
    %v289 = vmax.f32 %v287, %v288
    %v290 = vrot.slane %v289, 1
    %v291 = vmax.f32 %v289, %v290
    %v292 = vmax.f32 %v246, %v247
    %v293 = vrot.slane %v292, 4
    %v294 = vmax.f32 %v292, %v293
    %v295 = vrot.slane %v294, 2
    %v296 = vmax.f32 %v294, %v295
    %v297 = vrot.slane %v296, 1
    %v298 = vmax.f32 %v296, %v297
    %v299 = vmax.f32 %v248, %v249
    %v300 = vrot.slane %v299, 4
    %v301 = vmax.f32 %v299, %v300
    %v302 = vrot.slane %v301, 2
    %v303 = vmax.f32 %v301, %v302
    %v304 = vrot.slane %v303, 1
    %v305 = vmax.f32 %v303, %v304
    %vm306 = vcmp.eq.f32.partialorder %v234, %v256
    %vm307 = vcmp.eq.f32.partialorder %v235, %v256
    %vm308 = vcmp.eq.f32.partialorder %v236, %v263
    %vm309 = vcmp.eq.f32.partialorder %v237, %v263
    %vm310 = vcmp.eq.f32.partialorder %v238, %v270
    %vm311 = vcmp.eq.f32.partialorder %v239, %v270
    %vm312 = vcmp.eq.f32.partialorder %v240, %v277
    %vm313 = vcmp.eq.f32.partialorder %v241, %v277
    %vm314 = vcmp.eq.f32.partialorder %v242, %v284
    %vm315 = vcmp.eq.f32.partialorder %v243, %v284
    %vm316 = vcmp.eq.f32.partialorder %v244, %v291
    %vm317 = vcmp.eq.f32.partialorder %v245, %v291
    %vm318 = vcmp.eq.f32.partialorder %v246, %v298
    %vm319 = vcmp.eq.f32.partialorder %v247, %v298
    %vm320 = vcmp.eq.f32.partialorder %v248, %v305
    %vm321 = vcmp.eq.f32.partialorder %v249, %v305
    %v322 = vsel %vm306, %v40, 16
    %v323 = vsel %vm307, %v41, 16
    %v324 = vsel %vm308, %v40, 16
    %v325 = vsel %vm309, %v41, 16
    %v326 = vsel %vm310, %v40, 16
    %v327 = vsel %vm311, %v41, 16
    %v328 = vsel %vm312, %v40, 16
    %v329 = vsel %vm313, %v41, 16
    %v330 = vsel %vm314, %v40, 16
    %v331 = vsel %vm315, %v41, 16
    %v332 = vsel %vm316, %v40, 16
    %v333 = vsel %vm317, %v41, 16
    %v334 = vsel %vm318, %v40, 16
    %v335 = vsel %vm319, %v41, 16
    %v336 = vsel %vm320, %v40, 16
    %v337 = vsel %vm321, %v41, 16
    %vm338 = vcmp.lt.s32.totalorder %v322, %v323
    %v339 = vsel %vm338, %v322, %v323
    %v340 = vrot.slane %v339, 4
    %vm341 = vcmp.lt.s32.totalorder %v339, %v340
    %v342 = vsel %vm341, %v339, %v340
    %v343 = vrot.slane %v342, 2
    %vm344 = vcmp.lt.s32.totalorder %v342, %v343
    %v345 = vsel %vm344, %v342, %v343
    %v346 = vrot.slane %v345, 1
    %vm347 = vcmp.lt.s32.totalorder %v345, %v346
    %v348 = vsel %vm347, %v345, %v346
    %vm349 = vcmp.lt.s32.totalorder %v324, %v325
    %v350 = vsel %vm349, %v324, %v325
    %v351 = vrot.slane %v350, 4
    %vm352 = vcmp.lt.s32.totalorder %v350, %v351
    %v353 = vsel %vm352, %v350, %v351
    %v354 = vrot.slane %v353, 2
    %vm355 = vcmp.lt.s32.totalorder %v353, %v354
    %v356 = vsel %vm355, %v353, %v354
    %v357 = vrot.slane %v356, 1
    %vm358 = vcmp.lt.s32.totalorder %v356, %v357
    %v359 = vsel %vm358, %v356, %v357
    %vm360 = vcmp.lt.s32.totalorder %v326, %v327
    %v361 = vsel %vm360, %v326, %v327
    %v362 = vrot.slane %v361, 4
    %vm363 = vcmp.lt.s32.totalorder %v361, %v362
    %v364 = vsel %vm363, %v361, %v362
    %v365 = vrot.slane %v364, 2
    %vm366 = vcmp.lt.s32.totalorder %v364, %v365
    %v367 = vsel %vm366, %v364, %v365
    %v368 = vrot.slane %v367, 1
    %vm369 = vcmp.lt.s32.totalorder %v367, %v368
    %v370 = vsel %vm369, %v367, %v368
    %vm371 = vcmp.lt.s32.totalorder %v328, %v329
    %v372 = vsel %vm371, %v328, %v329
    %v373 = vrot.slane %v372, 4
    %vm374 = vcmp.lt.s32.totalorder %v372, %v373
    %v375 = vsel %vm374, %v372, %v373
    %v376 = vrot.slane %v375, 2
    %vm377 = vcmp.lt.s32.totalorder %v375, %v376
    %v378 = vsel %vm377, %v375, %v376
    %v379 = vrot.slane %v378, 1
    %vm380 = vcmp.lt.s32.totalorder %v378, %v379
    %v381 = vsel %vm380, %v378, %v379
    %vm382 = vcmp.lt.s32.totalorder %v330, %v331
    %v383 = vsel %vm382, %v330, %v331
    %v384 = vrot.slane %v383, 4
    %vm385 = vcmp.lt.s32.totalorder %v383, %v384
    %v386 = vsel %vm385, %v383, %v384
    %v387 = vrot.slane %v386, 2
    %vm388 = vcmp.lt.s32.totalorder %v386, %v387
    %v389 = vsel %vm388, %v386, %v387
    %v390 = vrot.slane %v389, 1
    %vm391 = vcmp.lt.s32.totalorder %v389, %v390
    %v392 = vsel %vm391, %v389, %v390
    %vm393 = vcmp.lt.s32.totalorder %v332, %v333
    %v394 = vsel %vm393, %v332, %v333
    %v395 = vrot.slane %v394, 4
    %vm396 = vcmp.lt.s32.totalorder %v394, %v395
    %v397 = vsel %vm396, %v394, %v395
    %v398 = vrot.slane %v397, 2
    %vm399 = vcmp.lt.s32.totalorder %v397, %v398
    %v400 = vsel %vm399, %v397, %v398
    %v401 = vrot.slane %v400, 1
    %vm402 = vcmp.lt.s32.totalorder %v400, %v401
    %v403 = vsel %vm402, %v400, %v401
    %vm404 = vcmp.lt.s32.totalorder %v334, %v335
    %v405 = vsel %vm404, %v334, %v335
    %v406 = vrot.slane %v405, 4
    %vm407 = vcmp.lt.s32.totalorder %v405, %v406
    %v408 = vsel %vm407, %v405, %v406
    %v409 = vrot.slane %v408, 2
    %vm410 = vcmp.lt.s32.totalorder %v408, %v409
    %v411 = vsel %vm410, %v408, %v409
    %v412 = vrot.slane %v411, 1
    %vm413 = vcmp.lt.s32.totalorder %v411, %v412
    %v414 = vsel %vm413, %v411, %v412
    %vm415 = vcmp.lt.s32.totalorder %v336, %v337
    %v416 = vsel %vm415, %v336, %v337
    %v417 = vrot.slane %v416, 4
    %vm418 = vcmp.lt.s32.totalorder %v416, %v417
    %v419 = vsel %vm418, %v416, %v417
    %v420 = vrot.slane %v419, 2
    %vm421 = vcmp.lt.s32.totalorder %v419, %v420
    %v422 = vsel %vm421, %v419, %v420
    %v423 = vrot.slane %v422, 1
    %vm424 = vcmp.lt.s32.totalorder %v422, %v423
    %v425 = vsel %vm424, %v422, %v423
    %vm426 = vcmp.eq.s32.totalorder %v40, %v348
    %vm427 = vcmp.eq.s32.totalorder %v41, %v348
    %vm428 = vcmp.eq.s32.totalorder %v40, %v359
    %vm429 = vcmp.eq.s32.totalorder %v41, %v359
    %vm430 = vcmp.eq.s32.totalorder %v40, %v370
    %vm431 = vcmp.eq.s32.totalorder %v41, %v370
    %vm432 = vcmp.eq.s32.totalorder %v40, %v381
    %vm433 = vcmp.eq.s32.totalorder %v41, %v381
    %vm434 = vcmp.eq.s32.totalorder %v40, %v392
    %vm435 = vcmp.eq.s32.totalorder %v41, %v392
    %vm436 = vcmp.eq.s32.totalorder %v40, %v403
    %vm437 = vcmp.eq.s32.totalorder %v41, %v403
    %vm438 = vcmp.eq.s32.totalorder %v40, %v414
    %vm439 = vcmp.eq.s32.totalorder %v41, %v414
    %vm440 = vcmp.eq.s32.totalorder %v40, %v425
    %vm441 = vcmp.eq.s32.totalorder %v41, %v425
    %v442 = vsel %vm426, -inf, %v234
    %v443 = vsel %vm427, -inf, %v235
    %v444 = vsel %vm428, -inf, %v236
    %v445 = vsel %vm429, -inf, %v237
    %v446 = vsel %vm430, -inf, %v238
    %v447 = vsel %vm431, -inf, %v239
    %v448 = vsel %vm432, -inf, %v240
    %v449 = vsel %vm433, -inf, %v241
    %v450 = vsel %vm434, -inf, %v242
    %v451 = vsel %vm435, -inf, %v243
    %v452 = vsel %vm436, -inf, %v244
    %v453 = vsel %vm437, -inf, %v245
    %v454 = vsel %vm438, -inf, %v246
    %v455 = vsel %vm439, -inf, %v247
    %v456 = vsel %vm440, -inf, %v248
    %v457 = vsel %vm441, -inf, %v249
    %v458 = vmax.f32 %v442, %v443
    %v459 = vrot.slane %v458, 4
    %v460 = vmax.f32 %v458, %v459
    %v461 = vrot.slane %v460, 2
    %v462 = vmax.f32 %v460, %v461
    %v463 = vrot.slane %v462, 1
    %v464 = vmax.f32 %v462, %v463
    %v465 = vmax.f32 %v444, %v445
    %v466 = vrot.slane %v465, 4
    %v467 = vmax.f32 %v465, %v466
    %v468 = vrot.slane %v467, 2
    %v469 = vmax.f32 %v467, %v468
    %v470 = vrot.slane %v469, 1
    %v471 = vmax.f32 %v469, %v470
    %v472 = vmax.f32 %v446, %v447
    %v473 = vrot.slane %v472, 4
    %v474 = vmax.f32 %v472, %v473
    %v475 = vrot.slane %v474, 2
    %v476 = vmax.f32 %v474, %v475
    %v477 = vrot.slane %v476, 1
    %v478 = vmax.f32 %v476, %v477
    %v479 = vmax.f32 %v448, %v449
    %v480 = vrot.slane %v479, 4
    %v481 = vmax.f32 %v479, %v480
    %v482 = vrot.slane %v481, 2
    %v483 = vmax.f32 %v481, %v482
    %v484 = vrot.slane %v483, 1
    %v485 = vmax.f32 %v483, %v484
    %v486 = vmax.f32 %v450, %v451
    %v487 = vrot.slane %v486, 4
    %v488 = vmax.f32 %v486, %v487
    %v489 = vrot.slane %v488, 2
    %v490 = vmax.f32 %v488, %v489
    %v491 = vrot.slane %v490, 1
    %v492 = vmax.f32 %v490, %v491
    %v493 = vmax.f32 %v452, %v453
    %v494 = vrot.slane %v493, 4
    %v495 = vmax.f32 %v493, %v494
    %v496 = vrot.slane %v495, 2
    %v497 = vmax.f32 %v495, %v496
    %v498 = vrot.slane %v497, 1
    %v499 = vmax.f32 %v497, %v498
    %v500 = vmax.f32 %v454, %v455
    %v501 = vrot.slane %v500, 4
    %v502 = vmax.f32 %v500, %v501
    %v503 = vrot.slane %v502, 2
    %v504 = vmax.f32 %v502, %v503
    %v505 = vrot.slane %v504, 1
    %v506 = vmax.f32 %v504, %v505
    %v507 = vmax.f32 %v456, %v457
    %v508 = vrot.slane %v507, 4
    %v509 = vmax.f32 %v507, %v508
    %v510 = vrot.slane %v509, 2
    %v511 = vmax.f32 %v509, %v510
    %v512 = vrot.slane %v511, 1
    %v513 = vmax.f32 %v511, %v512
    %vm514 = vcmp.eq.f32.partialorder %v442, %v464
    %vm515 = vcmp.eq.f32.partialorder %v443, %v464
    %vm516 = vcmp.eq.f32.partialorder %v444, %v471
    %vm517 = vcmp.eq.f32.partialorder %v445, %v471
    %vm518 = vcmp.eq.f32.partialorder %v446, %v478
    %vm519 = vcmp.eq.f32.partialorder %v447, %v478
    %vm520 = vcmp.eq.f32.partialorder %v448, %v485
    %vm521 = vcmp.eq.f32.partialorder %v449, %v485
    %vm522 = vcmp.eq.f32.partialorder %v450, %v492
    %vm523 = vcmp.eq.f32.partialorder %v451, %v492
    %vm524 = vcmp.eq.f32.partialorder %v452, %v499
    %vm525 = vcmp.eq.f32.partialorder %v453, %v499
    %vm526 = vcmp.eq.f32.partialorder %v454, %v506
    %vm527 = vcmp.eq.f32.partialorder %v455, %v506
    %vm528 = vcmp.eq.f32.partialorder %v456, %v513
    %vm529 = vcmp.eq.f32.partialorder %v457, %v513
    %v530 = vsel %vm514, %v40, 16
    %v531 = vsel %vm515, %v41, 16
    %v532 = vsel %vm516, %v40, 16
    %v533 = vsel %vm517, %v41, 16
    %v534 = vsel %vm518, %v40, 16
    %v535 = vsel %vm519, %v41, 16
    %v536 = vsel %vm520, %v40, 16
    %v537 = vsel %vm521, %v41, 16
    %v538 = vsel %vm522, %v40, 16
    %v539 = vsel %vm523, %v41, 16
    %v540 = vsel %vm524, %v40, 16
    %v541 = vsel %vm525, %v41, 16
    %v542 = vsel %vm526, %v40, 16
    %v543 = vsel %vm527, %v41, 16
    %v544 = vsel %vm528, %v40, 16
    %v545 = vsel %vm529, %v41, 16
    %vm546 = vcmp.lt.s32.totalorder %v530, %v531
    %v547 = vsel %vm546, %v530, %v531
    %v548 = vrot.slane %v547, 4
    %vm549 = vcmp.lt.s32.totalorder %v547, %v548
    %v550 = vsel %vm549, %v547, %v548
    %v551 = vrot.slane %v550, 2
    %vm552 = vcmp.lt.s32.totalorder %v550, %v551
    %v553 = vsel %vm552, %v550, %v551
    %v554 = vrot.slane %v553, 1
    %vm555 = vcmp.lt.s32.totalorder %v553, %v554
    %v556 = vsel %vm555, %v553, %v554
    %vm557 = vcmp.lt.s32.totalorder %v532, %v533
    %v558 = vsel %vm557, %v532, %v533
    %v559 = vrot.slane %v558, 4
    %vm560 = vcmp.lt.s32.totalorder %v558, %v559
    %v561 = vsel %vm560, %v558, %v559
    %v562 = vrot.slane %v561, 2
    %vm563 = vcmp.lt.s32.totalorder %v561, %v562
    %v564 = vsel %vm563, %v561, %v562
    %v565 = vrot.slane %v564, 1
    %vm566 = vcmp.lt.s32.totalorder %v564, %v565
    %v567 = vsel %vm566, %v564, %v565
    %vm568 = vcmp.lt.s32.totalorder %v534, %v535
    %v569 = vsel %vm568, %v534, %v535
    %v570 = vrot.slane %v569, 4
    %vm571 = vcmp.lt.s32.totalorder %v569, %v570
    %v572 = vsel %vm571, %v569, %v570
    %v573 = vrot.slane %v572, 2
    %vm574 = vcmp.lt.s32.totalorder %v572, %v573
    %v575 = vsel %vm574, %v572, %v573
    %v576 = vrot.slane %v575, 1
    %vm577 = vcmp.lt.s32.totalorder %v575, %v576
    %v578 = vsel %vm577, %v575, %v576
    %vm579 = vcmp.lt.s32.totalorder %v536, %v537
    %v580 = vsel %vm579, %v536, %v537
    %v581 = vrot.slane %v580, 4
    %vm582 = vcmp.lt.s32.totalorder %v580, %v581
    %v583 = vsel %vm582, %v580, %v581
    %v584 = vrot.slane %v583, 2
    %vm585 = vcmp.lt.s32.totalorder %v583, %v584
    %v586 = vsel %vm585, %v583, %v584
    %v587 = vrot.slane %v586, 1
    %vm588 = vcmp.lt.s32.totalorder %v586, %v587
    %v589 = vsel %vm588, %v586, %v587
    %vm590 = vcmp.lt.s32.totalorder %v538, %v539
    %v591 = vsel %vm590, %v538, %v539
    %v592 = vrot.slane %v591, 4
    %vm593 = vcmp.lt.s32.totalorder %v591, %v592
    %v594 = vsel %vm593, %v591, %v592
    %v595 = vrot.slane %v594, 2
    %vm596 = vcmp.lt.s32.totalorder %v594, %v595
    %v597 = vsel %vm596, %v594, %v595
    %v598 = vrot.slane %v597, 1
    %vm599 = vcmp.lt.s32.totalorder %v597, %v598
    %v600 = vsel %vm599, %v597, %v598
    %vm601 = vcmp.lt.s32.totalorder %v540, %v541
    %v602 = vsel %vm601, %v540, %v541
    %v603 = vrot.slane %v602, 4
    %vm604 = vcmp.lt.s32.totalorder %v602, %v603
    %v605 = vsel %vm604, %v602, %v603
    %v606 = vrot.slane %v605, 2
    %vm607 = vcmp.lt.s32.totalorder %v605, %v606
    %v608 = vsel %vm607, %v605, %v606
    %v609 = vrot.slane %v608, 1
    %vm610 = vcmp.lt.s32.totalorder %v608, %v609
    %v611 = vsel %vm610, %v608, %v609
    %vm612 = vcmp.lt.s32.totalorder %v542, %v543
    %v613 = vsel %vm612, %v542, %v543
    %v614 = vrot.slane %v613, 4
    %vm615 = vcmp.lt.s32.totalorder %v613, %v614
    %v616 = vsel %vm615, %v613, %v614
    %v617 = vrot.slane %v616, 2
    %vm618 = vcmp.lt.s32.totalorder %v616, %v617
    %v619 = vsel %vm618, %v616, %v617
    %v620 = vrot.slane %v619, 1
    %vm621 = vcmp.lt.s32.totalorder %v619, %v620
    %v622 = vsel %vm621, %v619, %v620
    %vm623 = vcmp.lt.s32.totalorder %v544, %v545
    %v624 = vsel %vm623, %v544, %v545
    %v625 = vrot.slane %v624, 4
    %vm626 = vcmp.lt.s32.totalorder %v624, %v625
    %v627 = vsel %vm626, %v624, %v625
    %v628 = vrot.slane %v627, 2
    %vm629 = vcmp.lt.s32.totalorder %v627, %v628
    %v630 = vsel %vm629, %v627, %v628
    %v631 = vrot.slane %v630, 1
    %vm632 = vcmp.lt.s32.totalorder %v630, %v631
    %v633 = vsel %vm632, %v630, %v631
    %vm634 = vcmp.eq.s32.totalorder %v40, %v556
    %vm635 = vcmp.eq.s32.totalorder %v41, %v556
    %vm636 = vcmp.eq.s32.totalorder %v40, %v567
    %vm637 = vcmp.eq.s32.totalorder %v41, %v567
    %vm638 = vcmp.eq.s32.totalorder %v40, %v578
    %vm639 = vcmp.eq.s32.totalorder %v41, %v578
    %vm640 = vcmp.eq.s32.totalorder %v40, %v589
    %vm641 = vcmp.eq.s32.totalorder %v41, %v589
    %vm642 = vcmp.eq.s32.totalorder %v40, %v600
    %vm643 = vcmp.eq.s32.totalorder %v41, %v600
    %vm644 = vcmp.eq.s32.totalorder %v40, %v611
    %vm645 = vcmp.eq.s32.totalorder %v41, %v611
    %vm646 = vcmp.eq.s32.totalorder %v40, %v622
    %vm647 = vcmp.eq.s32.totalorder %v41, %v622
    %vm648 = vcmp.eq.s32.totalorder %v40, %v633
    %vm649 = vcmp.eq.s32.totalorder %v41, %v633
    %v650 = vsel %vm634, -inf, %v442
    %v651 = vsel %vm635, -inf, %v443
    %v652 = vsel %vm636, -inf, %v444
    %v653 = vsel %vm637, -inf, %v445
    %v654 = vsel %vm638, -inf, %v446
    %v655 = vsel %vm639, -inf, %v447
    %v656 = vsel %vm640, -inf, %v448
    %v657 = vsel %vm641, -inf, %v449
    %v658 = vsel %vm642, -inf, %v450
    %v659 = vsel %vm643, -inf, %v451
    %v660 = vsel %vm644, -inf, %v452
    %v661 = vsel %vm645, -inf, %v453
    %v662 = vsel %vm646, -inf, %v454
    %v663 = vsel %vm647, -inf, %v455
    %v664 = vsel %vm648, -inf, %v456
    %v665 = vsel %vm649, -inf, %v457
    %v666 = vmax.f32 %v650, %v651
    %v667 = vrot.slane %v666, 4
    %v668 = vmax.f32 %v666, %v667
    %v669 = vrot.slane %v668, 2
    %v670 = vmax.f32 %v668, %v669
    %v671 = vrot.slane %v670, 1
    %v672 = vmax.f32 %v670, %v671
    %v673 = vmax.f32 %v652, %v653
    %v674 = vrot.slane %v673, 4
    %v675 = vmax.f32 %v673, %v674
    %v676 = vrot.slane %v675, 2
    %v677 = vmax.f32 %v675, %v676
    %v678 = vrot.slane %v677, 1
    %v679 = vmax.f32 %v677, %v678
    %v680 = vmax.f32 %v654, %v655
    %v681 = vrot.slane %v680, 4
    %v682 = vmax.f32 %v680, %v681
    %v683 = vrot.slane %v682, 2
    %v684 = vmax.f32 %v682, %v683
    %v685 = vrot.slane %v684, 1
    %v686 = vmax.f32 %v684, %v685
    %v687 = vmax.f32 %v656, %v657
    %v688 = vrot.slane %v687, 4
    %v689 = vmax.f32 %v687, %v688
    %v690 = vrot.slane %v689, 2
    %v691 = vmax.f32 %v689, %v690
    %v692 = vrot.slane %v691, 1
    %v693 = vmax.f32 %v691, %v692
    %v694 = vmax.f32 %v658, %v659
    %v695 = vrot.slane %v694, 4
    %v696 = vmax.f32 %v694, %v695
    %v697 = vrot.slane %v696, 2
    %v698 = vmax.f32 %v696, %v697
    %v699 = vrot.slane %v698, 1
    %v700 = vmax.f32 %v698, %v699
    %v701 = vmax.f32 %v660, %v661
    %v702 = vrot.slane %v701, 4
    %v703 = vmax.f32 %v701, %v702
    %v704 = vrot.slane %v703, 2
    %v705 = vmax.f32 %v703, %v704
    %v706 = vrot.slane %v705, 1
    %v707 = vmax.f32 %v705, %v706
    %v708 = vmax.f32 %v662, %v663
    %v709 = vrot.slane %v708, 4
    %v710 = vmax.f32 %v708, %v709
    %v711 = vrot.slane %v710, 2
    %v712 = vmax.f32 %v710, %v711
    %v713 = vrot.slane %v712, 1
    %v714 = vmax.f32 %v712, %v713
    %v715 = vmax.f32 %v664, %v665
    %v716 = vrot.slane %v715, 4
    %v717 = vmax.f32 %v715, %v716
    %v718 = vrot.slane %v717, 2
    %v719 = vmax.f32 %v717, %v718
    %v720 = vrot.slane %v719, 1
    %v721 = vmax.f32 %v719, %v720
    %vm722 = vcmp.eq.f32.partialorder %v650, %v672
    %vm723 = vcmp.eq.f32.partialorder %v651, %v672
    %vm724 = vcmp.eq.f32.partialorder %v652, %v679
    %vm725 = vcmp.eq.f32.partialorder %v653, %v679
    %vm726 = vcmp.eq.f32.partialorder %v654, %v686
    %vm727 = vcmp.eq.f32.partialorder %v655, %v686
    %vm728 = vcmp.eq.f32.partialorder %v656, %v693
    %vm729 = vcmp.eq.f32.partialorder %v657, %v693
    %vm730 = vcmp.eq.f32.partialorder %v658, %v700
    %vm731 = vcmp.eq.f32.partialorder %v659, %v700
    %vm732 = vcmp.eq.f32.partialorder %v660, %v707
    %vm733 = vcmp.eq.f32.partialorder %v661, %v707
    %vm734 = vcmp.eq.f32.partialorder %v662, %v714
    %vm735 = vcmp.eq.f32.partialorder %v663, %v714
    %vm736 = vcmp.eq.f32.partialorder %v664, %v721
    %vm737 = vcmp.eq.f32.partialorder %v665, %v721
    %v738 = vsel %vm722, %v40, 16
    %v739 = vsel %vm723, %v41, 16
    %v740 = vsel %vm724, %v40, 16
    %v741 = vsel %vm725, %v41, 16
    %v742 = vsel %vm726, %v40, 16
    %v743 = vsel %vm727, %v41, 16
    %v744 = vsel %vm728, %v40, 16
    %v745 = vsel %vm729, %v41, 16
    %v746 = vsel %vm730, %v40, 16
    %v747 = vsel %vm731, %v41, 16
    %v748 = vsel %vm732, %v40, 16
    %v749 = vsel %vm733, %v41, 16
    %v750 = vsel %vm734, %v40, 16
    %v751 = vsel %vm735, %v41, 16
    %v752 = vsel %vm736, %v40, 16
    %v753 = vsel %vm737, %v41, 16
    %vm754 = vcmp.lt.s32.totalorder %v738, %v739
    %v755 = vsel %vm754, %v738, %v739
    %v756 = vrot.slane %v755, 4
    %vm757 = vcmp.lt.s32.totalorder %v755, %v756
    %v758 = vsel %vm757, %v755, %v756
    %v759 = vrot.slane %v758, 2
    %vm760 = vcmp.lt.s32.totalorder %v758, %v759
    %v761 = vsel %vm760, %v758, %v759
    %v762 = vrot.slane %v761, 1
    %vm763 = vcmp.lt.s32.totalorder %v761, %v762
    %v764 = vsel %vm763, %v761, %v762
    %vm765 = vcmp.lt.s32.totalorder %v740, %v741
    %v766 = vsel %vm765, %v740, %v741
    %v767 = vrot.slane %v766, 4
    %vm768 = vcmp.lt.s32.totalorder %v766, %v767
    %v769 = vsel %vm768, %v766, %v767
    %v770 = vrot.slane %v769, 2
    %vm771 = vcmp.lt.s32.totalorder %v769, %v770
    %v772 = vsel %vm771, %v769, %v770
    %v773 = vrot.slane %v772, 1
    %vm774 = vcmp.lt.s32.totalorder %v772, %v773
    %v775 = vsel %vm774, %v772, %v773
    %vm776 = vcmp.lt.s32.totalorder %v742, %v743
    %v777 = vsel %vm776, %v742, %v743
    %v778 = vrot.slane %v777, 4
    %vm779 = vcmp.lt.s32.totalorder %v777, %v778
    %v780 = vsel %vm779, %v777, %v778
    %v781 = vrot.slane %v780, 2
    %vm782 = vcmp.lt.s32.totalorder %v780, %v781
    %v783 = vsel %vm782, %v780, %v781
    %v784 = vrot.slane %v783, 1
    %vm785 = vcmp.lt.s32.totalorder %v783, %v784
    %v786 = vsel %vm785, %v783, %v784
    %vm787 = vcmp.lt.s32.totalorder %v744, %v745
    %v788 = vsel %vm787, %v744, %v745
    %v789 = vrot.slane %v788, 4
    %vm790 = vcmp.lt.s32.totalorder %v788, %v789
    %v791 = vsel %vm790, %v788, %v789
    %v792 = vrot.slane %v791, 2
    %vm793 = vcmp.lt.s32.totalorder %v791, %v792
    %v794 = vsel %vm793, %v791, %v792
    %v795 = vrot.slane %v794, 1
    %vm796 = vcmp.lt.s32.totalorder %v794, %v795
    %v797 = vsel %vm796, %v794, %v795
    %vm798 = vcmp.lt.s32.totalorder %v746, %v747
    %v799 = vsel %vm798, %v746, %v747
    %v800 = vrot.slane %v799, 4
    %vm801 = vcmp.lt.s32.totalorder %v799, %v800
    %v802 = vsel %vm801, %v799, %v800
    %v803 = vrot.slane %v802, 2
    %vm804 = vcmp.lt.s32.totalorder %v802, %v803
    %v805 = vsel %vm804, %v802, %v803
    %v806 = vrot.slane %v805, 1
    %vm807 = vcmp.lt.s32.totalorder %v805, %v806
    %v808 = vsel %vm807, %v805, %v806
    %vm809 = vcmp.lt.s32.totalorder %v748, %v749
    %v810 = vsel %vm809, %v748, %v749
    %v811 = vrot.slane %v810, 4
    %vm812 = vcmp.lt.s32.totalorder %v810, %v811
    %v813 = vsel %vm812, %v810, %v811
    %v814 = vrot.slane %v813, 2
    %vm815 = vcmp.lt.s32.totalorder %v813, %v814
    %v816 = vsel %vm815, %v813, %v814
    %v817 = vrot.slane %v816, 1
    %vm818 = vcmp.lt.s32.totalorder %v816, %v817
    %v819 = vsel %vm818, %v816, %v817
    %vm820 = vcmp.lt.s32.totalorder %v750, %v751
    %v821 = vsel %vm820, %v750, %v751
    %v822 = vrot.slane %v821, 4
    %vm823 = vcmp.lt.s32.totalorder %v821, %v822
    %v824 = vsel %vm823, %v821, %v822
    %v825 = vrot.slane %v824, 2
    %vm826 = vcmp.lt.s32.totalorder %v824, %v825
    %v827 = vsel %vm826, %v824, %v825
    %v828 = vrot.slane %v827, 1
    %vm829 = vcmp.lt.s32.totalorder %v827, %v828
    %v830 = vsel %vm829, %v827, %v828
    %vm831 = vcmp.lt.s32.totalorder %v752, %v753
    %v832 = vsel %vm831, %v752, %v753
    %v833 = vrot.slane %v832, 4
    %vm834 = vcmp.lt.s32.totalorder %v832, %v833
    %v835 = vsel %vm834, %v832, %v833
    %v836 = vrot.slane %v835, 2
    %vm837 = vcmp.lt.s32.totalorder %v835, %v836
    %v838 = vsel %vm837, %v835, %v836
    %v839 = vrot.slane %v838, 1
    %vm840 = vcmp.lt.s32.totalorder %v838, %v839
    %v841 = vsel %vm840, %v838, %v839
    %vm842 = vcmp.eq.s32.totalorder %v40, %v764
    %vm843 = vcmp.eq.s32.totalorder %v41, %v764
    %vm844 = vcmp.eq.s32.totalorder %v40, %v775
    %vm845 = vcmp.eq.s32.totalorder %v41, %v775
    %vm846 = vcmp.eq.s32.totalorder %v40, %v786
    %vm847 = vcmp.eq.s32.totalorder %v41, %v786
    %vm848 = vcmp.eq.s32.totalorder %v40, %v797
    %vm849 = vcmp.eq.s32.totalorder %v41, %v797
    %vm850 = vcmp.eq.s32.totalorder %v40, %v808
    %vm851 = vcmp.eq.s32.totalorder %v41, %v808
    %vm852 = vcmp.eq.s32.totalorder %v40, %v819
    %vm853 = vcmp.eq.s32.totalorder %v41, %v819
    %vm854 = vcmp.eq.s32.totalorder %v40, %v830
    %vm855 = vcmp.eq.s32.totalorder %v41, %v830
    %vm856 = vcmp.eq.s32.totalorder %v40, %v841
    %vm857 = vcmp.eq.s32.totalorder %v41, %v841
    %v858 = vsel %vm842, -inf, %v650
    %v859 = vsel %vm843, -inf, %v651
    %v860 = vsel %vm844, -inf, %v652
    %v861 = vsel %vm845, -inf, %v653
    %v862 = vsel %vm846, -inf, %v654
    %v863 = vsel %vm847, -inf, %v655
    %v864 = vsel %vm848, -inf, %v656
    %v865 = vsel %vm849, -inf, %v657
    %v866 = vsel %vm850, -inf, %v658
    %v867 = vsel %vm851, -inf, %v659
    %v868 = vsel %vm852, -inf, %v660
    %v869 = vsel %vm853, -inf, %v661
    %v870 = vsel %vm854, -inf, %v662
    %v871 = vsel %vm855, -inf, %v663
    %v872 = vsel %vm856, -inf, %v664
    %v873 = vsel %vm857, -inf, %v665
    %v874 = vmax.f32 %v858, %v859
    %v875 = vrot.slane %v874, 4
    %v876 = vmax.f32 %v874, %v875
    %v877 = vrot.slane %v876, 2
    %v878 = vmax.f32 %v876, %v877
    %v879 = vrot.slane %v878, 1
    %v880 = vmax.f32 %v878, %v879
    %v881 = vmax.f32 %v860, %v861
    %v882 = vrot.slane %v881, 4
    %v883 = vmax.f32 %v881, %v882
    %v884 = vrot.slane %v883, 2
    %v885 = vmax.f32 %v883, %v884
    %v886 = vrot.slane %v885, 1
    %v887 = vmax.f32 %v885, %v886
    %v888 = vmax.f32 %v862, %v863
    %v889 = vrot.slane %v888, 4
    %v890 = vmax.f32 %v888, %v889
    %v891 = vrot.slane %v890, 2
    %v892 = vmax.f32 %v890, %v891
    %v893 = vrot.slane %v892, 1
    %v894 = vmax.f32 %v892, %v893
    %v895 = vmax.f32 %v864, %v865
    %v896 = vrot.slane %v895, 4
    %v897 = vmax.f32 %v895, %v896
    %v898 = vrot.slane %v897, 2
    %v899 = vmax.f32 %v897, %v898
    %v900 = vrot.slane %v899, 1
    %v901 = vmax.f32 %v899, %v900
    %v902 = vmax.f32 %v866, %v867
    %v903 = vrot.slane %v902, 4
    %v904 = vmax.f32 %v902, %v903
    %v905 = vrot.slane %v904, 2
    %v906 = vmax.f32 %v904, %v905
    %v907 = vrot.slane %v906, 1
    %v908 = vmax.f32 %v906, %v907
    %v909 = vmax.f32 %v868, %v869
    %v910 = vrot.slane %v909, 4
    %v911 = vmax.f32 %v909, %v910
    %v912 = vrot.slane %v911, 2
    %v913 = vmax.f32 %v911, %v912
    %v914 = vrot.slane %v913, 1
    %v915 = vmax.f32 %v913, %v914
    %v916 = vmax.f32 %v870, %v871
    %v917 = vrot.slane %v916, 4
    %v918 = vmax.f32 %v916, %v917
    %v919 = vrot.slane %v918, 2
    %v920 = vmax.f32 %v918, %v919
    %v921 = vrot.slane %v920, 1
    %v922 = vmax.f32 %v920, %v921
    %v923 = vmax.f32 %v872, %v873
    %v924 = vrot.slane %v923, 4
    %v925 = vmax.f32 %v923, %v924
    %v926 = vrot.slane %v925, 2
    %v927 = vmax.f32 %v925, %v926
    %v928 = vrot.slane %v927, 1
    %v929 = vmax.f32 %v927, %v928
    %vm930 = vcmp.eq.f32.partialorder %v858, %v880
    %vm931 = vcmp.eq.f32.partialorder %v859, %v880
    %vm932 = vcmp.eq.f32.partialorder %v860, %v887
    %vm933 = vcmp.eq.f32.partialorder %v861, %v887
    %vm934 = vcmp.eq.f32.partialorder %v862, %v894
    %vm935 = vcmp.eq.f32.partialorder %v863, %v894
    %vm936 = vcmp.eq.f32.partialorder %v864, %v901
    %vm937 = vcmp.eq.f32.partialorder %v865, %v901
    %vm938 = vcmp.eq.f32.partialorder %v866, %v908
    %vm939 = vcmp.eq.f32.partialorder %v867, %v908
    %vm940 = vcmp.eq.f32.partialorder %v868, %v915
    %vm941 = vcmp.eq.f32.partialorder %v869, %v915
    %vm942 = vcmp.eq.f32.partialorder %v870, %v922
    %vm943 = vcmp.eq.f32.partialorder %v871, %v922
    %vm944 = vcmp.eq.f32.partialorder %v872, %v929
    %vm945 = vcmp.eq.f32.partialorder %v873, %v929
    %v946 = vsel %vm930, %v40, 16
    %v947 = vsel %vm931, %v41, 16
    %v948 = vsel %vm932, %v40, 16
    %v949 = vsel %vm933, %v41, 16
    %v950 = vsel %vm934, %v40, 16
    %v951 = vsel %vm935, %v41, 16
    %v952 = vsel %vm936, %v40, 16
    %v953 = vsel %vm937, %v41, 16
    %v954 = vsel %vm938, %v40, 16
    %v955 = vsel %vm939, %v41, 16
    %v956 = vsel %vm940, %v40, 16
    %v957 = vsel %vm941, %v41, 16
    %v958 = vsel %vm942, %v40, 16
    %v959 = vsel %vm943, %v41, 16
    %v960 = vsel %vm944, %v40, 16
    %v961 = vsel %vm945, %v41, 16
    %vm962 = vcmp.lt.s32.totalorder %v946, %v947
    %v963 = vsel %vm962, %v946, %v947
    %v964 = vrot.slane %v963, 4
    %vm965 = vcmp.lt.s32.totalorder %v963, %v964
    %v966 = vsel %vm965, %v963, %v964
    %v967 = vrot.slane %v966, 2
    %vm968 = vcmp.lt.s32.totalorder %v966, %v967
    %v969 = vsel %vm968, %v966, %v967
    %v970 = vrot.slane %v969, 1
    %vm971 = vcmp.lt.s32.totalorder %v969, %v970
    %v972 = vsel %vm971, %v969, %v970
    %vm973 = vcmp.lt.s32.totalorder %v948, %v949
    %v974 = vsel %vm973, %v948, %v949
    %v975 = vrot.slane %v974, 4
    %vm976 = vcmp.lt.s32.totalorder %v974, %v975
    %v977 = vsel %vm976, %v974, %v975
    %v978 = vrot.slane %v977, 2
    %vm979 = vcmp.lt.s32.totalorder %v977, %v978
    %v980 = vsel %vm979, %v977, %v978
    %v981 = vrot.slane %v980, 1
    %vm982 = vcmp.lt.s32.totalorder %v980, %v981
    %v983 = vsel %vm982, %v980, %v981
    %vm984 = vcmp.lt.s32.totalorder %v950, %v951
    %v985 = vsel %vm984, %v950, %v951
    %v986 = vrot.slane %v985, 4
    %vm987 = vcmp.lt.s32.totalorder %v985, %v986
    %v988 = vsel %vm987, %v985, %v986
    %v989 = vrot.slane %v988, 2
    %vm990 = vcmp.lt.s32.totalorder %v988, %v989
    %v991 = vsel %vm990, %v988, %v989
    %v992 = vrot.slane %v991, 1
    %vm993 = vcmp.lt.s32.totalorder %v991, %v992
    %v994 = vsel %vm993, %v991, %v992
    %vm995 = vcmp.lt.s32.totalorder %v952, %v953
    %v996 = vsel %vm995, %v952, %v953
    %v997 = vrot.slane %v996, 4
    %vm998 = vcmp.lt.s32.totalorder %v996, %v997
    %v999 = vsel %vm998, %v996, %v997
    %v1000 = vrot.slane %v999, 2
    %vm1001 = vcmp.lt.s32.totalorder %v999, %v1000
    %v1002 = vsel %vm1001, %v999, %v1000
    %v1003 = vrot.slane %v1002, 1
    %vm1004 = vcmp.lt.s32.totalorder %v1002, %v1003
    %v1005 = vsel %vm1004, %v1002, %v1003
    %vm1006 = vcmp.lt.s32.totalorder %v954, %v955
    %v1007 = vsel %vm1006, %v954, %v955
    %v1008 = vrot.slane %v1007, 4
    %vm1009 = vcmp.lt.s32.totalorder %v1007, %v1008
    %v1010 = vsel %vm1009, %v1007, %v1008
    %v1011 = vrot.slane %v1010, 2
    %vm1012 = vcmp.lt.s32.totalorder %v1010, %v1011
    %v1013 = vsel %vm1012, %v1010, %v1011
    %v1014 = vrot.slane %v1013, 1
    %vm1015 = vcmp.lt.s32.totalorder %v1013, %v1014
    %v1016 = vsel %vm1015, %v1013, %v1014
    %vm1017 = vcmp.lt.s32.totalorder %v956, %v957
    %v1018 = vsel %vm1017, %v956, %v957
    %v1019 = vrot.slane %v1018, 4
    %vm1020 = vcmp.lt.s32.totalorder %v1018, %v1019
    %v1021 = vsel %vm1020, %v1018, %v1019
    %v1022 = vrot.slane %v1021, 2
    %vm1023 = vcmp.lt.s32.totalorder %v1021, %v1022
    %v1024 = vsel %vm1023, %v1021, %v1022
    %v1025 = vrot.slane %v1024, 1
    %vm1026 = vcmp.lt.s32.totalorder %v1024, %v1025
    %v1027 = vsel %vm1026, %v1024, %v1025
    %vm1028 = vcmp.lt.s32.totalorder %v958, %v959
    %v1029 = vsel %vm1028, %v958, %v959
    %v1030 = vrot.slane %v1029, 4
    %vm1031 = vcmp.lt.s32.totalorder %v1029, %v1030
    %v1032 = vsel %vm1031, %v1029, %v1030
    %v1033 = vrot.slane %v1032, 2
    %vm1034 = vcmp.lt.s32.totalorder %v1032, %v1033
    %v1035 = vsel %vm1034, %v1032, %v1033
    %v1036 = vrot.slane %v1035, 1
    %vm1037 = vcmp.lt.s32.totalorder %v1035, %v1036
    %v1038 = vsel %vm1037, %v1035, %v1036
    %vm1039 = vcmp.lt.s32.totalorder %v960, %v961
    %v1040 = vsel %vm1039, %v960, %v961
    %v1041 = vrot.slane %v1040, 4
    %vm1042 = vcmp.lt.s32.totalorder %v1040, %v1041
    %v1043 = vsel %vm1042, %v1040, %v1041
    %v1044 = vrot.slane %v1043, 2
    %vm1045 = vcmp.lt.s32.totalorder %v1043, %v1044
    %v1046 = vsel %vm1045, %v1043, %v1044
    %v1047 = vrot.slane %v1046, 1
    %vm1048 = vcmp.lt.s32.totalorder %v1046, %v1047
    %v1049 = vsel %vm1048, %v1046, %v1047
    %vm1050 = vcmp.eq.s32.totalorder %v40, %v972
    %vm1051 = vcmp.eq.s32.totalorder %v41, %v972
    %vm1052 = vcmp.eq.s32.totalorder %v40, %v983
    %vm1053 = vcmp.eq.s32.totalorder %v41, %v983
    %vm1054 = vcmp.eq.s32.totalorder %v40, %v994
    %vm1055 = vcmp.eq.s32.totalorder %v41, %v994
    %vm1056 = vcmp.eq.s32.totalorder %v40, %v1005
    %vm1057 = vcmp.eq.s32.totalorder %v41, %v1005
    %vm1058 = vcmp.eq.s32.totalorder %v40, %v1016
    %vm1059 = vcmp.eq.s32.totalorder %v41, %v1016
    %vm1060 = vcmp.eq.s32.totalorder %v40, %v1027
    %vm1061 = vcmp.eq.s32.totalorder %v41, %v1027
    %vm1062 = vcmp.eq.s32.totalorder %v40, %v1038
    %vm1063 = vcmp.eq.s32.totalorder %v41, %v1038
    %vm1064 = vcmp.eq.s32.totalorder %v40, %v1049
    %vm1065 = vcmp.eq.s32.totalorder %v41, %v1049
    %v1066 = vsel %vm1050, -inf, %v858
    %v1067 = vsel %vm1051, -inf, %v859
    %v1068 = vsel %vm1052, -inf, %v860
    %v1069 = vsel %vm1053, -inf, %v861
    %v1070 = vsel %vm1054, -inf, %v862
    %v1071 = vsel %vm1055, -inf, %v863
    %v1072 = vsel %vm1056, -inf, %v864
    %v1073 = vsel %vm1057, -inf, %v865
    %v1074 = vsel %vm1058, -inf, %v866
    %v1075 = vsel %vm1059, -inf, %v867
    %v1076 = vsel %vm1060, -inf, %v868
    %v1077 = vsel %vm1061, -inf, %v869
    %v1078 = vsel %vm1062, -inf, %v870
    %v1079 = vsel %vm1063, -inf, %v871
    %v1080 = vsel %vm1064, -inf, %v872
    %v1081 = vsel %vm1065, -inf, %v873
    %v1082 = vmax.f32 %v1066, %v1067
    %v1083 = vrot.slane %v1082, 4
    %v1084 = vmax.f32 %v1082, %v1083
    %v1085 = vrot.slane %v1084, 2
    %v1086 = vmax.f32 %v1084, %v1085
    %v1087 = vrot.slane %v1086, 1
    %v1088 = vmax.f32 %v1086, %v1087
    %v1089 = vmax.f32 %v1068, %v1069
    %v1090 = vrot.slane %v1089, 4
    %v1091 = vmax.f32 %v1089, %v1090
    %v1092 = vrot.slane %v1091, 2
    %v1093 = vmax.f32 %v1091, %v1092
    %v1094 = vrot.slane %v1093, 1
    %v1095 = vmax.f32 %v1093, %v1094
    %v1096 = vmax.f32 %v1070, %v1071
    %v1097 = vrot.slane %v1096, 4
    %v1098 = vmax.f32 %v1096, %v1097
    %v1099 = vrot.slane %v1098, 2
    %v1100 = vmax.f32 %v1098, %v1099
    %v1101 = vrot.slane %v1100, 1
    %v1102 = vmax.f32 %v1100, %v1101
    %v1103 = vmax.f32 %v1072, %v1073
    %v1104 = vrot.slane %v1103, 4
    %v1105 = vmax.f32 %v1103, %v1104
    %v1106 = vrot.slane %v1105, 2
    %v1107 = vmax.f32 %v1105, %v1106
    %v1108 = vrot.slane %v1107, 1
    %v1109 = vmax.f32 %v1107, %v1108
    %v1110 = vmax.f32 %v1074, %v1075
    %v1111 = vrot.slane %v1110, 4
    %v1112 = vmax.f32 %v1110, %v1111
    %v1113 = vrot.slane %v1112, 2
    %v1114 = vmax.f32 %v1112, %v1113
    %v1115 = vrot.slane %v1114, 1
    %v1116 = vmax.f32 %v1114, %v1115
    %v1117 = vmax.f32 %v1076, %v1077
    %v1118 = vrot.slane %v1117, 4
    %v1119 = vmax.f32 %v1117, %v1118
    %v1120 = vrot.slane %v1119, 2
    %v1121 = vmax.f32 %v1119, %v1120
    %v1122 = vrot.slane %v1121, 1
    %v1123 = vmax.f32 %v1121, %v1122
    %v1124 = vmax.f32 %v1078, %v1079
    %v1125 = vrot.slane %v1124, 4
    %v1126 = vmax.f32 %v1124, %v1125
    %v1127 = vrot.slane %v1126, 2
    %v1128 = vmax.f32 %v1126, %v1127
    %v1129 = vrot.slane %v1128, 1
    %v1130 = vmax.f32 %v1128, %v1129
    %v1131 = vmax.f32 %v1080, %v1081
    %v1132 = vrot.slane %v1131, 4
    %v1133 = vmax.f32 %v1131, %v1132
    %v1134 = vrot.slane %v1133, 2
    %v1135 = vmax.f32 %v1133, %v1134
    %v1136 = vrot.slane %v1135, 1
    %v1137 = vmax.f32 %v1135, %v1136
    %vm1138 = vcmp.eq.f32.partialorder %v1066, %v1088
    %vm1139 = vcmp.eq.f32.partialorder %v1067, %v1088
    %vm1140 = vcmp.eq.f32.partialorder %v1068, %v1095
    %vm1141 = vcmp.eq.f32.partialorder %v1069, %v1095
    %vm1142 = vcmp.eq.f32.partialorder %v1070, %v1102
    %vm1143 = vcmp.eq.f32.partialorder %v1071, %v1102
    %vm1144 = vcmp.eq.f32.partialorder %v1072, %v1109
    %vm1145 = vcmp.eq.f32.partialorder %v1073, %v1109
    %vm1146 = vcmp.eq.f32.partialorder %v1074, %v1116
    %vm1147 = vcmp.eq.f32.partialorder %v1075, %v1116
    %vm1148 = vcmp.eq.f32.partialorder %v1076, %v1123
    %vm1149 = vcmp.eq.f32.partialorder %v1077, %v1123
    %vm1150 = vcmp.eq.f32.partialorder %v1078, %v1130
    %vm1151 = vcmp.eq.f32.partialorder %v1079, %v1130
    %vm1152 = vcmp.eq.f32.partialorder %v1080, %v1137
    %vm1153 = vcmp.eq.f32.partialorder %v1081, %v1137
    %v1154 = vsel %vm1138, %v40, 16
    %v1155 = vsel %vm1139, %v41, 16
    %v1156 = vsel %vm1140, %v40, 16
    %v1157 = vsel %vm1141, %v41, 16
    %v1158 = vsel %vm1142, %v40, 16
    %v1159 = vsel %vm1143, %v41, 16
    %v1160 = vsel %vm1144, %v40, 16
    %v1161 = vsel %vm1145, %v41, 16
    %v1162 = vsel %vm1146, %v40, 16
    %v1163 = vsel %vm1147, %v41, 16
    %v1164 = vsel %vm1148, %v40, 16
    %v1165 = vsel %vm1149, %v41, 16
    %v1166 = vsel %vm1150, %v40, 16
    %v1167 = vsel %vm1151, %v41, 16
    %v1168 = vsel %vm1152, %v40, 16
    %v1169 = vsel %vm1153, %v41, 16
    %vm1170 = vcmp.lt.s32.totalorder %v1154, %v1155
    %v1171 = vsel %vm1170, %v1154, %v1155
    %v1172 = vrot.slane %v1171, 4
    %vm1173 = vcmp.lt.s32.totalorder %v1171, %v1172
    %v1174 = vsel %vm1173, %v1171, %v1172
    %v1175 = vrot.slane %v1174, 2
    %vm1176 = vcmp.lt.s32.totalorder %v1174, %v1175
    %v1177 = vsel %vm1176, %v1174, %v1175
    %v1178 = vrot.slane %v1177, 1
    %vm1179 = vcmp.lt.s32.totalorder %v1177, %v1178
    %v1180 = vsel %vm1179, %v1177, %v1178
    %vm1181 = vcmp.lt.s32.totalorder %v1156, %v1157
    %v1182 = vsel %vm1181, %v1156, %v1157
    %v1183 = vrot.slane %v1182, 4
    %vm1184 = vcmp.lt.s32.totalorder %v1182, %v1183
    %v1185 = vsel %vm1184, %v1182, %v1183
    %v1186 = vrot.slane %v1185, 2
    %vm1187 = vcmp.lt.s32.totalorder %v1185, %v1186
    %v1188 = vsel %vm1187, %v1185, %v1186
    %v1189 = vrot.slane %v1188, 1
    %vm1190 = vcmp.lt.s32.totalorder %v1188, %v1189
    %v1191 = vsel %vm1190, %v1188, %v1189
    %vm1192 = vcmp.lt.s32.totalorder %v1158, %v1159
    %v1193 = vsel %vm1192, %v1158, %v1159
    %v1194 = vrot.slane %v1193, 4
    %vm1195 = vcmp.lt.s32.totalorder %v1193, %v1194
    %v1196 = vsel %vm1195, %v1193, %v1194
    %v1197 = vrot.slane %v1196, 2
    %vm1198 = vcmp.lt.s32.totalorder %v1196, %v1197
    %v1199 = vsel %vm1198, %v1196, %v1197
    %v1200 = vrot.slane %v1199, 1
    %vm1201 = vcmp.lt.s32.totalorder %v1199, %v1200
    %v1202 = vsel %vm1201, %v1199, %v1200
    %vm1203 = vcmp.lt.s32.totalorder %v1160, %v1161
    %v1204 = vsel %vm1203, %v1160, %v1161
    %v1205 = vrot.slane %v1204, 4
    %vm1206 = vcmp.lt.s32.totalorder %v1204, %v1205
    %v1207 = vsel %vm1206, %v1204, %v1205
    %v1208 = vrot.slane %v1207, 2
    %vm1209 = vcmp.lt.s32.totalorder %v1207, %v1208
    %v1210 = vsel %vm1209, %v1207, %v1208
    %v1211 = vrot.slane %v1210, 1
    %vm1212 = vcmp.lt.s32.totalorder %v1210, %v1211
    %v1213 = vsel %vm1212, %v1210, %v1211
    %vm1214 = vcmp.lt.s32.totalorder %v1162, %v1163
    %v1215 = vsel %vm1214, %v1162, %v1163
    %v1216 = vrot.slane %v1215, 4
    %vm1217 = vcmp.lt.s32.totalorder %v1215, %v1216
    %v1218 = vsel %vm1217, %v1215, %v1216
    %v1219 = vrot.slane %v1218, 2
    %vm1220 = vcmp.lt.s32.totalorder %v1218, %v1219
    %v1221 = vsel %vm1220, %v1218, %v1219
    %v1222 = vrot.slane %v1221, 1
    %vm1223 = vcmp.lt.s32.totalorder %v1221, %v1222
    %v1224 = vsel %vm1223, %v1221, %v1222
    %vm1225 = vcmp.lt.s32.totalorder %v1164, %v1165
    %v1226 = vsel %vm1225, %v1164, %v1165
    %v1227 = vrot.slane %v1226, 4
    %vm1228 = vcmp.lt.s32.totalorder %v1226, %v1227
    %v1229 = vsel %vm1228, %v1226, %v1227
    %v1230 = vrot.slane %v1229, 2
    %vm1231 = vcmp.lt.s32.totalorder %v1229, %v1230
    %v1232 = vsel %vm1231, %v1229, %v1230
    %v1233 = vrot.slane %v1232, 1
    %vm1234 = vcmp.lt.s32.totalorder %v1232, %v1233
    %v1235 = vsel %vm1234, %v1232, %v1233
    %vm1236 = vcmp.lt.s32.totalorder %v1166, %v1167
    %v1237 = vsel %vm1236, %v1166, %v1167
    %v1238 = vrot.slane %v1237, 4
    %vm1239 = vcmp.lt.s32.totalorder %v1237, %v1238
    %v1240 = vsel %vm1239, %v1237, %v1238
    %v1241 = vrot.slane %v1240, 2
    %vm1242 = vcmp.lt.s32.totalorder %v1240, %v1241
    %v1243 = vsel %vm1242, %v1240, %v1241
    %v1244 = vrot.slane %v1243, 1
    %vm1245 = vcmp.lt.s32.totalorder %v1243, %v1244
    %v1246 = vsel %vm1245, %v1243, %v1244
    %vm1247 = vcmp.lt.s32.totalorder %v1168, %v1169
    %v1248 = vsel %vm1247, %v1168, %v1169
    %v1249 = vrot.slane %v1248, 4
    %vm1250 = vcmp.lt.s32.totalorder %v1248, %v1249
    %v1251 = vsel %vm1250, %v1248, %v1249
    %v1252 = vrot.slane %v1251, 2
    %vm1253 = vcmp.lt.s32.totalorder %v1251, %v1252
    %v1254 = vsel %vm1253, %v1251, %v1252
    %v1255 = vrot.slane %v1254, 1
    %vm1256 = vcmp.lt.s32.totalorder %v1254, %v1255
    %v1257 = vsel %vm1256, %v1254, %v1255
    %vm1258 = vcmp.eq.s32.totalorder %v40, %v1180
    %vm1259 = vcmp.eq.s32.totalorder %v41, %v1180
    %vm1260 = vcmp.eq.s32.totalorder %v40, %v1191
    %vm1261 = vcmp.eq.s32.totalorder %v41, %v1191
    %vm1262 = vcmp.eq.s32.totalorder %v40, %v1202
    %vm1263 = vcmp.eq.s32.totalorder %v41, %v1202
    %vm1264 = vcmp.eq.s32.totalorder %v40, %v1213
    %vm1265 = vcmp.eq.s32.totalorder %v41, %v1213
    %vm1266 = vcmp.eq.s32.totalorder %v40, %v1224
    %vm1267 = vcmp.eq.s32.totalorder %v41, %v1224
    %vm1268 = vcmp.eq.s32.totalorder %v40, %v1235
    %vm1269 = vcmp.eq.s32.totalorder %v41, %v1235
    %vm1270 = vcmp.eq.s32.totalorder %v40, %v1246
    %vm1271 = vcmp.eq.s32.totalorder %v41, %v1246
    %vm1272 = vcmp.eq.s32.totalorder %v40, %v1257
    %vm1273 = vcmp.eq.s32.totalorder %v41, %v1257
    %v1274 = vsel %vm1258, -inf, %v1066
    %v1275 = vsel %vm1259, -inf, %v1067
    %v1276 = vsel %vm1260, -inf, %v1068
    %v1277 = vsel %vm1261, -inf, %v1069
    %v1278 = vsel %vm1262, -inf, %v1070
    %v1279 = vsel %vm1263, -inf, %v1071
    %v1280 = vsel %vm1264, -inf, %v1072
    %v1281 = vsel %vm1265, -inf, %v1073
    %v1282 = vsel %vm1266, -inf, %v1074
    %v1283 = vsel %vm1267, -inf, %v1075
    %v1284 = vsel %vm1268, -inf, %v1076
    %v1285 = vsel %vm1269, -inf, %v1077
    %v1286 = vsel %vm1270, -inf, %v1078
    %v1287 = vsel %vm1271, -inf, %v1079
    %v1288 = vsel %vm1272, -inf, %v1080
    %v1289 = vsel %vm1273, -inf, %v1081
    %v1290 = vmax.f32 %v1274, %v1275
    %v1291 = vrot.slane %v1290, 4
    %v1292 = vmax.f32 %v1290, %v1291
    %v1293 = vrot.slane %v1292, 2
    %v1294 = vmax.f32 %v1292, %v1293
    %v1295 = vrot.slane %v1294, 1
    %v1296 = vmax.f32 %v1294, %v1295
    %v1297 = vmax.f32 %v1276, %v1277
    %v1298 = vrot.slane %v1297, 4
    %v1299 = vmax.f32 %v1297, %v1298
    %v1300 = vrot.slane %v1299, 2
    %v1301 = vmax.f32 %v1299, %v1300
    %v1302 = vrot.slane %v1301, 1
    %v1303 = vmax.f32 %v1301, %v1302
    %v1304 = vmax.f32 %v1278, %v1279
    %v1305 = vrot.slane %v1304, 4
    %v1306 = vmax.f32 %v1304, %v1305
    %v1307 = vrot.slane %v1306, 2
    %v1308 = vmax.f32 %v1306, %v1307
    %v1309 = vrot.slane %v1308, 1
    %v1310 = vmax.f32 %v1308, %v1309
    %v1311 = vmax.f32 %v1280, %v1281
    %v1312 = vrot.slane %v1311, 4
    %v1313 = vmax.f32 %v1311, %v1312
    %v1314 = vrot.slane %v1313, 2
    %v1315 = vmax.f32 %v1313, %v1314
    %v1316 = vrot.slane %v1315, 1
    %v1317 = vmax.f32 %v1315, %v1316
    %v1318 = vmax.f32 %v1282, %v1283
    %v1319 = vrot.slane %v1318, 4
    %v1320 = vmax.f32 %v1318, %v1319
    %v1321 = vrot.slane %v1320, 2
    %v1322 = vmax.f32 %v1320, %v1321
    %v1323 = vrot.slane %v1322, 1
    %v1324 = vmax.f32 %v1322, %v1323
    %v1325 = vmax.f32 %v1284, %v1285
    %v1326 = vrot.slane %v1325, 4
    %v1327 = vmax.f32 %v1325, %v1326
    %v1328 = vrot.slane %v1327, 2
    %v1329 = vmax.f32 %v1327, %v1328
    %v1330 = vrot.slane %v1329, 1
    %v1331 = vmax.f32 %v1329, %v1330
    %v1332 = vmax.f32 %v1286, %v1287
    %v1333 = vrot.slane %v1332, 4
    %v1334 = vmax.f32 %v1332, %v1333
    %v1335 = vrot.slane %v1334, 2
    %v1336 = vmax.f32 %v1334, %v1335
    %v1337 = vrot.slane %v1336, 1
    %v1338 = vmax.f32 %v1336, %v1337
    %v1339 = vmax.f32 %v1288, %v1289
    %v1340 = vrot.slane %v1339, 4
    %v1341 = vmax.f32 %v1339, %v1340
    %v1342 = vrot.slane %v1341, 2
    %v1343 = vmax.f32 %v1341, %v1342
    %v1344 = vrot.slane %v1343, 1
    %v1345 = vmax.f32 %v1343, %v1344
    %vm1346 = vcmp.eq.f32.partialorder %v1274, %v1296
    %vm1347 = vcmp.eq.f32.partialorder %v1275, %v1296
    %vm1348 = vcmp.eq.f32.partialorder %v1276, %v1303
    %vm1349 = vcmp.eq.f32.partialorder %v1277, %v1303
    %vm1350 = vcmp.eq.f32.partialorder %v1278, %v1310
    %vm1351 = vcmp.eq.f32.partialorder %v1279, %v1310
    %vm1352 = vcmp.eq.f32.partialorder %v1280, %v1317
    %vm1353 = vcmp.eq.f32.partialorder %v1281, %v1317
    %vm1354 = vcmp.eq.f32.partialorder %v1282, %v1324
    %vm1355 = vcmp.eq.f32.partialorder %v1283, %v1324
    %vm1356 = vcmp.eq.f32.partialorder %v1284, %v1331
    %vm1357 = vcmp.eq.f32.partialorder %v1285, %v1331
    %vm1358 = vcmp.eq.f32.partialorder %v1286, %v1338
    %vm1359 = vcmp.eq.f32.partialorder %v1287, %v1338
    %vm1360 = vcmp.eq.f32.partialorder %v1288, %v1345
    %vm1361 = vcmp.eq.f32.partialorder %v1289, %v1345
    %v1362 = vsel %vm1346, %v40, 16
    %v1363 = vsel %vm1347, %v41, 16
    %v1364 = vsel %vm1348, %v40, 16
    %v1365 = vsel %vm1349, %v41, 16
    %v1366 = vsel %vm1350, %v40, 16
    %v1367 = vsel %vm1351, %v41, 16
    %v1368 = vsel %vm1352, %v40, 16
    %v1369 = vsel %vm1353, %v41, 16
    %v1370 = vsel %vm1354, %v40, 16
    %v1371 = vsel %vm1355, %v41, 16
    %v1372 = vsel %vm1356, %v40, 16
    %v1373 = vsel %vm1357, %v41, 16
    %v1374 = vsel %vm1358, %v40, 16
    %v1375 = vsel %vm1359, %v41, 16
    %v1376 = vsel %vm1360, %v40, 16
    %v1377 = vsel %vm1361, %v41, 16
    %vm1378 = vcmp.lt.s32.totalorder %v1362, %v1363
    %v1379 = vsel %vm1378, %v1362, %v1363
    %v1380 = vrot.slane %v1379, 4
    %vm1381 = vcmp.lt.s32.totalorder %v1379, %v1380
    %v1382 = vsel %vm1381, %v1379, %v1380
    %v1383 = vrot.slane %v1382, 2
    %vm1384 = vcmp.lt.s32.totalorder %v1382, %v1383
    %v1385 = vsel %vm1384, %v1382, %v1383
    %v1386 = vrot.slane %v1385, 1
    %vm1387 = vcmp.lt.s32.totalorder %v1385, %v1386
    %v1388 = vsel %vm1387, %v1385, %v1386
    %vm1389 = vcmp.lt.s32.totalorder %v1364, %v1365
    %v1390 = vsel %vm1389, %v1364, %v1365
    %v1391 = vrot.slane %v1390, 4
    %vm1392 = vcmp.lt.s32.totalorder %v1390, %v1391
    %v1393 = vsel %vm1392, %v1390, %v1391
    %v1394 = vrot.slane %v1393, 2
    %vm1395 = vcmp.lt.s32.totalorder %v1393, %v1394
    %v1396 = vsel %vm1395, %v1393, %v1394
    %v1397 = vrot.slane %v1396, 1
    %vm1398 = vcmp.lt.s32.totalorder %v1396, %v1397
    %v1399 = vsel %vm1398, %v1396, %v1397
    %vm1400 = vcmp.lt.s32.totalorder %v1366, %v1367
    %v1401 = vsel %vm1400, %v1366, %v1367
    %v1402 = vrot.slane %v1401, 4
    %vm1403 = vcmp.lt.s32.totalorder %v1401, %v1402
    %v1404 = vsel %vm1403, %v1401, %v1402
    %v1405 = vrot.slane %v1404, 2
    %vm1406 = vcmp.lt.s32.totalorder %v1404, %v1405
    %v1407 = vsel %vm1406, %v1404, %v1405
    %v1408 = vrot.slane %v1407, 1
    %vm1409 = vcmp.lt.s32.totalorder %v1407, %v1408
    %v1410 = vsel %vm1409, %v1407, %v1408
    %vm1411 = vcmp.lt.s32.totalorder %v1368, %v1369
    %v1412 = vsel %vm1411, %v1368, %v1369
    %v1413 = vrot.slane %v1412, 4
    %vm1414 = vcmp.lt.s32.totalorder %v1412, %v1413
    %v1415 = vsel %vm1414, %v1412, %v1413
    %v1416 = vrot.slane %v1415, 2
    %vm1417 = vcmp.lt.s32.totalorder %v1415, %v1416
    %v1418 = vsel %vm1417, %v1415, %v1416
    %v1419 = vrot.slane %v1418, 1
    %vm1420 = vcmp.lt.s32.totalorder %v1418, %v1419
    %v1421 = vsel %vm1420, %v1418, %v1419
    %vm1422 = vcmp.lt.s32.totalorder %v1370, %v1371
    %v1423 = vsel %vm1422, %v1370, %v1371
    %v1424 = vrot.slane %v1423, 4
    %vm1425 = vcmp.lt.s32.totalorder %v1423, %v1424
    %v1426 = vsel %vm1425, %v1423, %v1424
    %v1427 = vrot.slane %v1426, 2
    %vm1428 = vcmp.lt.s32.totalorder %v1426, %v1427
    %v1429 = vsel %vm1428, %v1426, %v1427
    %v1430 = vrot.slane %v1429, 1
    %vm1431 = vcmp.lt.s32.totalorder %v1429, %v1430
    %v1432 = vsel %vm1431, %v1429, %v1430
    %vm1433 = vcmp.lt.s32.totalorder %v1372, %v1373
    %v1434 = vsel %vm1433, %v1372, %v1373
    %v1435 = vrot.slane %v1434, 4
    %vm1436 = vcmp.lt.s32.totalorder %v1434, %v1435
    %v1437 = vsel %vm1436, %v1434, %v1435
    %v1438 = vrot.slane %v1437, 2
    %vm1439 = vcmp.lt.s32.totalorder %v1437, %v1438
    %v1440 = vsel %vm1439, %v1437, %v1438
    %v1441 = vrot.slane %v1440, 1
    %vm1442 = vcmp.lt.s32.totalorder %v1440, %v1441
    %v1443 = vsel %vm1442, %v1440, %v1441
    %vm1444 = vcmp.lt.s32.totalorder %v1374, %v1375
    %v1445 = vsel %vm1444, %v1374, %v1375
    %v1446 = vrot.slane %v1445, 4
    %vm1447 = vcmp.lt.s32.totalorder %v1445, %v1446
    %v1448 = vsel %vm1447, %v1445, %v1446
    %v1449 = vrot.slane %v1448, 2
    %vm1450 = vcmp.lt.s32.totalorder %v1448, %v1449
    %v1451 = vsel %vm1450, %v1448, %v1449
    %v1452 = vrot.slane %v1451, 1
    %vm1453 = vcmp.lt.s32.totalorder %v1451, %v1452
    %v1454 = vsel %vm1453, %v1451, %v1452
    %vm1455 = vcmp.lt.s32.totalorder %v1376, %v1377
    %v1456 = vsel %vm1455, %v1376, %v1377
    %v1457 = vrot.slane %v1456, 4
    %vm1458 = vcmp.lt.s32.totalorder %v1456, %v1457
    %v1459 = vsel %vm1458, %v1456, %v1457
    %v1460 = vrot.slane %v1459, 2
    %vm1461 = vcmp.lt.s32.totalorder %v1459, %v1460
    %v1462 = vsel %vm1461, %v1459, %v1460
    %v1463 = vrot.slane %v1462, 1
    %vm1464 = vcmp.lt.s32.totalorder %v1462, %v1463
    %v1465 = vsel %vm1464, %v1462, %v1463
    %vm1466 = vcmp.eq.s32.totalorder %v40, %v1388
    %vm1467 = vcmp.eq.s32.totalorder %v41, %v1388
    %vm1468 = vcmp.eq.s32.totalorder %v40, %v1399
    %vm1469 = vcmp.eq.s32.totalorder %v41, %v1399
    %vm1470 = vcmp.eq.s32.totalorder %v40, %v1410
    %vm1471 = vcmp.eq.s32.totalorder %v41, %v1410
    %vm1472 = vcmp.eq.s32.totalorder %v40, %v1421
    %vm1473 = vcmp.eq.s32.totalorder %v41, %v1421
    %vm1474 = vcmp.eq.s32.totalorder %v40, %v1432
    %vm1475 = vcmp.eq.s32.totalorder %v41, %v1432
    %vm1476 = vcmp.eq.s32.totalorder %v40, %v1443
    %vm1477 = vcmp.eq.s32.totalorder %v41, %v1443
    %vm1478 = vcmp.eq.s32.totalorder %v40, %v1454
    %vm1479 = vcmp.eq.s32.totalorder %v41, %v1454
    %vm1480 = vcmp.eq.s32.totalorder %v40, %v1465
    %vm1481 = vcmp.eq.s32.totalorder %v41, %v1465
    %v1482 = vsel %vm1466, -inf, %v1274
    %v1483 = vsel %vm1467, -inf, %v1275
    %v1484 = vsel %vm1468, -inf, %v1276
    %v1485 = vsel %vm1469, -inf, %v1277
    %v1486 = vsel %vm1470, -inf, %v1278
    %v1487 = vsel %vm1471, -inf, %v1279
    %v1488 = vsel %vm1472, -inf, %v1280
    %v1489 = vsel %vm1473, -inf, %v1281
    %v1490 = vsel %vm1474, -inf, %v1282
    %v1491 = vsel %vm1475, -inf, %v1283
    %v1492 = vsel %vm1476, -inf, %v1284
    %v1493 = vsel %vm1477, -inf, %v1285
    %v1494 = vsel %vm1478, -inf, %v1286
    %v1495 = vsel %vm1479, -inf, %v1287
    %v1496 = vsel %vm1480, -inf, %v1288
    %v1497 = vsel %vm1481, -inf, %v1289
    %v1498 = vmax.f32 %v1482, %v1483
    %v1499 = vrot.slane %v1498, 4
    %v1500 = vmax.f32 %v1498, %v1499
    %v1501 = vrot.slane %v1500, 2
    %v1502 = vmax.f32 %v1500, %v1501
    %v1503 = vrot.slane %v1502, 1
    %v1504 = vmax.f32 %v1502, %v1503
    %v1505 = vmax.f32 %v1484, %v1485
    %v1506 = vrot.slane %v1505, 4
    %v1507 = vmax.f32 %v1505, %v1506
    %v1508 = vrot.slane %v1507, 2
    %v1509 = vmax.f32 %v1507, %v1508
    %v1510 = vrot.slane %v1509, 1
    %v1511 = vmax.f32 %v1509, %v1510
    %v1512 = vmax.f32 %v1486, %v1487
    %v1513 = vrot.slane %v1512, 4
    %v1514 = vmax.f32 %v1512, %v1513
    %v1515 = vrot.slane %v1514, 2
    %v1516 = vmax.f32 %v1514, %v1515
    %v1517 = vrot.slane %v1516, 1
    %v1518 = vmax.f32 %v1516, %v1517
    %v1519 = vmax.f32 %v1488, %v1489
    %v1520 = vrot.slane %v1519, 4
    %v1521 = vmax.f32 %v1519, %v1520
    %v1522 = vrot.slane %v1521, 2
    %v1523 = vmax.f32 %v1521, %v1522
    %v1524 = vrot.slane %v1523, 1
    %v1525 = vmax.f32 %v1523, %v1524
    %v1526 = vmax.f32 %v1490, %v1491
    %v1527 = vrot.slane %v1526, 4
    %v1528 = vmax.f32 %v1526, %v1527
    %v1529 = vrot.slane %v1528, 2
    %v1530 = vmax.f32 %v1528, %v1529
    %v1531 = vrot.slane %v1530, 1
    %v1532 = vmax.f32 %v1530, %v1531
    %v1533 = vmax.f32 %v1492, %v1493
    %v1534 = vrot.slane %v1533, 4
    %v1535 = vmax.f32 %v1533, %v1534
    %v1536 = vrot.slane %v1535, 2
    %v1537 = vmax.f32 %v1535, %v1536
    %v1538 = vrot.slane %v1537, 1
    %v1539 = vmax.f32 %v1537, %v1538
    %v1540 = vmax.f32 %v1494, %v1495
    %v1541 = vrot.slane %v1540, 4
    %v1542 = vmax.f32 %v1540, %v1541
    %v1543 = vrot.slane %v1542, 2
    %v1544 = vmax.f32 %v1542, %v1543
    %v1545 = vrot.slane %v1544, 1
    %v1546 = vmax.f32 %v1544, %v1545
    %v1547 = vmax.f32 %v1496, %v1497
    %v1548 = vrot.slane %v1547, 4
    %v1549 = vmax.f32 %v1547, %v1548
    %v1550 = vrot.slane %v1549, 2
    %v1551 = vmax.f32 %v1549, %v1550
    %v1552 = vrot.slane %v1551, 1
    %v1553 = vmax.f32 %v1551, %v1552
    %vm1554 = vcmp.eq.f32.partialorder %v1482, %v1504
    %vm1555 = vcmp.eq.f32.partialorder %v1483, %v1504
    %vm1556 = vcmp.eq.f32.partialorder %v1484, %v1511
    %vm1557 = vcmp.eq.f32.partialorder %v1485, %v1511
    %vm1558 = vcmp.eq.f32.partialorder %v1486, %v1518
    %vm1559 = vcmp.eq.f32.partialorder %v1487, %v1518
    %vm1560 = vcmp.eq.f32.partialorder %v1488, %v1525
    %vm1561 = vcmp.eq.f32.partialorder %v1489, %v1525
    %vm1562 = vcmp.eq.f32.partialorder %v1490, %v1532
    %vm1563 = vcmp.eq.f32.partialorder %v1491, %v1532
    %vm1564 = vcmp.eq.f32.partialorder %v1492, %v1539
    %vm1565 = vcmp.eq.f32.partialorder %v1493, %v1539
    %vm1566 = vcmp.eq.f32.partialorder %v1494, %v1546
    %vm1567 = vcmp.eq.f32.partialorder %v1495, %v1546
    %vm1568 = vcmp.eq.f32.partialorder %v1496, %v1553
    %vm1569 = vcmp.eq.f32.partialorder %v1497, %v1553
    %v1570 = vsel %vm1554, %v40, 16
    %v1571 = vsel %vm1555, %v41, 16
    %v1572 = vsel %vm1556, %v40, 16
    %v1573 = vsel %vm1557, %v41, 16
    %v1574 = vsel %vm1558, %v40, 16
    %v1575 = vsel %vm1559, %v41, 16
    %v1576 = vsel %vm1560, %v40, 16
    %v1577 = vsel %vm1561, %v41, 16
    %v1578 = vsel %vm1562, %v40, 16
    %v1579 = vsel %vm1563, %v41, 16
    %v1580 = vsel %vm1564, %v40, 16
    %v1581 = vsel %vm1565, %v41, 16
    %v1582 = vsel %vm1566, %v40, 16
    %v1583 = vsel %vm1567, %v41, 16
    %v1584 = vsel %vm1568, %v40, 16
    %v1585 = vsel %vm1569, %v41, 16
    %vm1586 = vcmp.lt.s32.totalorder %v1570, %v1571
    %v1587 = vsel %vm1586, %v1570, %v1571
    %v1588 = vrot.slane %v1587, 4
    %vm1589 = vcmp.lt.s32.totalorder %v1587, %v1588
    %v1590 = vsel %vm1589, %v1587, %v1588
    %v1591 = vrot.slane %v1590, 2
    %vm1592 = vcmp.lt.s32.totalorder %v1590, %v1591
    %v1593 = vsel %vm1592, %v1590, %v1591
    %v1594 = vrot.slane %v1593, 1
    %vm1595 = vcmp.lt.s32.totalorder %v1593, %v1594
    %v1596 = vsel %vm1595, %v1593, %v1594
    %vm1597 = vcmp.lt.s32.totalorder %v1572, %v1573
    %v1598 = vsel %vm1597, %v1572, %v1573
    %v1599 = vrot.slane %v1598, 4
    %vm1600 = vcmp.lt.s32.totalorder %v1598, %v1599
    %v1601 = vsel %vm1600, %v1598, %v1599
    %v1602 = vrot.slane %v1601, 2
    %vm1603 = vcmp.lt.s32.totalorder %v1601, %v1602
    %v1604 = vsel %vm1603, %v1601, %v1602
    %v1605 = vrot.slane %v1604, 1
    %vm1606 = vcmp.lt.s32.totalorder %v1604, %v1605
    %v1607 = vsel %vm1606, %v1604, %v1605
    %vm1608 = vcmp.lt.s32.totalorder %v1574, %v1575
    %v1609 = vsel %vm1608, %v1574, %v1575
    %v1610 = vrot.slane %v1609, 4
    %vm1611 = vcmp.lt.s32.totalorder %v1609, %v1610
    %v1612 = vsel %vm1611, %v1609, %v1610
    %v1613 = vrot.slane %v1612, 2
    %vm1614 = vcmp.lt.s32.totalorder %v1612, %v1613
    %v1615 = vsel %vm1614, %v1612, %v1613
    %v1616 = vrot.slane %v1615, 1
    %vm1617 = vcmp.lt.s32.totalorder %v1615, %v1616
    %v1618 = vsel %vm1617, %v1615, %v1616
    %vm1619 = vcmp.lt.s32.totalorder %v1576, %v1577
    %v1620 = vsel %vm1619, %v1576, %v1577
    %v1621 = vrot.slane %v1620, 4
    %vm1622 = vcmp.lt.s32.totalorder %v1620, %v1621
    %v1623 = vsel %vm1622, %v1620, %v1621
    %v1624 = vrot.slane %v1623, 2
    %vm1625 = vcmp.lt.s32.totalorder %v1623, %v1624
    %v1626 = vsel %vm1625, %v1623, %v1624
    %v1627 = vrot.slane %v1626, 1
    %vm1628 = vcmp.lt.s32.totalorder %v1626, %v1627
    %v1629 = vsel %vm1628, %v1626, %v1627
    %vm1630 = vcmp.lt.s32.totalorder %v1578, %v1579
    %v1631 = vsel %vm1630, %v1578, %v1579
    %v1632 = vrot.slane %v1631, 4
    %vm1633 = vcmp.lt.s32.totalorder %v1631, %v1632
    %v1634 = vsel %vm1633, %v1631, %v1632
    %v1635 = vrot.slane %v1634, 2
    %vm1636 = vcmp.lt.s32.totalorder %v1634, %v1635
    %v1637 = vsel %vm1636, %v1634, %v1635
    %v1638 = vrot.slane %v1637, 1
    %vm1639 = vcmp.lt.s32.totalorder %v1637, %v1638
    %v1640 = vsel %vm1639, %v1637, %v1638
    %vm1641 = vcmp.lt.s32.totalorder %v1580, %v1581
    %v1642 = vsel %vm1641, %v1580, %v1581
    %v1643 = vrot.slane %v1642, 4
    %vm1644 = vcmp.lt.s32.totalorder %v1642, %v1643
    %v1645 = vsel %vm1644, %v1642, %v1643
    %v1646 = vrot.slane %v1645, 2
    %vm1647 = vcmp.lt.s32.totalorder %v1645, %v1646
    %v1648 = vsel %vm1647, %v1645, %v1646
    %v1649 = vrot.slane %v1648, 1
    %vm1650 = vcmp.lt.s32.totalorder %v1648, %v1649
    %v1651 = vsel %vm1650, %v1648, %v1649
    %vm1652 = vcmp.lt.s32.totalorder %v1582, %v1583
    %v1653 = vsel %vm1652, %v1582, %v1583
    %v1654 = vrot.slane %v1653, 4
    %vm1655 = vcmp.lt.s32.totalorder %v1653, %v1654
    %v1656 = vsel %vm1655, %v1653, %v1654
    %v1657 = vrot.slane %v1656, 2
    %vm1658 = vcmp.lt.s32.totalorder %v1656, %v1657
    %v1659 = vsel %vm1658, %v1656, %v1657
    %v1660 = vrot.slane %v1659, 1
    %vm1661 = vcmp.lt.s32.totalorder %v1659, %v1660
    %v1662 = vsel %vm1661, %v1659, %v1660
    %vm1663 = vcmp.lt.s32.totalorder %v1584, %v1585
    %v1664 = vsel %vm1663, %v1584, %v1585
    %v1665 = vrot.slane %v1664, 4
    %vm1666 = vcmp.lt.s32.totalorder %v1664, %v1665
    %v1667 = vsel %vm1666, %v1664, %v1665
    %v1668 = vrot.slane %v1667, 2
    %vm1669 = vcmp.lt.s32.totalorder %v1667, %v1668
    %v1670 = vsel %vm1669, %v1667, %v1668
    %v1671 = vrot.slane %v1670, 1
    %vm1672 = vcmp.lt.s32.totalorder %v1670, %v1671
    %v1673 = vsel %vm1672, %v1670, %v1671
    %vm1674 = vcmp.eq.s32.totalorder %v40, %v1596
    %vm1675 = vcmp.eq.s32.totalorder %v41, %v1596
    %vm1676 = vcmp.eq.s32.totalorder %v40, %v1607
    %vm1677 = vcmp.eq.s32.totalorder %v41, %v1607
    %vm1678 = vcmp.eq.s32.totalorder %v40, %v1618
    %vm1679 = vcmp.eq.s32.totalorder %v41, %v1618
    %vm1680 = vcmp.eq.s32.totalorder %v40, %v1629
    %vm1681 = vcmp.eq.s32.totalorder %v41, %v1629
    %vm1682 = vcmp.eq.s32.totalorder %v40, %v1640
    %vm1683 = vcmp.eq.s32.totalorder %v41, %v1640
    %vm1684 = vcmp.eq.s32.totalorder %v40, %v1651
    %vm1685 = vcmp.eq.s32.totalorder %v41, %v1651
    %vm1686 = vcmp.eq.s32.totalorder %v40, %v1662
    %vm1687 = vcmp.eq.s32.totalorder %v41, %v1662
    %vm1688 = vcmp.eq.s32.totalorder %v40, %v1673
    %vm1689 = vcmp.eq.s32.totalorder %v41, %v1673
    %v1690 = vsel %vm1674, -inf, %v1482
    %v1691 = vsel %vm1675, -inf, %v1483
    %v1692 = vsel %vm1676, -inf, %v1484
    %v1693 = vsel %vm1677, -inf, %v1485
    %v1694 = vsel %vm1678, -inf, %v1486
    %v1695 = vsel %vm1679, -inf, %v1487
    %v1696 = vsel %vm1680, -inf, %v1488
    %v1697 = vsel %vm1681, -inf, %v1489
    %v1698 = vsel %vm1682, -inf, %v1490
    %v1699 = vsel %vm1683, -inf, %v1491
    %v1700 = vsel %vm1684, -inf, %v1492
    %v1701 = vsel %vm1685, -inf, %v1493
    %v1702 = vsel %vm1686, -inf, %v1494
    %v1703 = vsel %vm1687, -inf, %v1495
    %v1704 = vsel %vm1688, -inf, %v1496
    %v1705 = vsel %vm1689, -inf, %v1497
    %v1706 = vmax.f32 %v1690, %v1691
    %v1707 = vrot.slane %v1706, 4
    %v1708 = vmax.f32 %v1706, %v1707
    %v1709 = vrot.slane %v1708, 2
    %v1710 = vmax.f32 %v1708, %v1709
    %v1711 = vrot.slane %v1710, 1
    %v1712 = vmax.f32 %v1710, %v1711
    %v1713 = vmax.f32 %v1692, %v1693
    %v1714 = vrot.slane %v1713, 4
    %v1715 = vmax.f32 %v1713, %v1714
    %v1716 = vrot.slane %v1715, 2
    %v1717 = vmax.f32 %v1715, %v1716
    %v1718 = vrot.slane %v1717, 1
    %v1719 = vmax.f32 %v1717, %v1718
    %v1720 = vmax.f32 %v1694, %v1695
    %v1721 = vrot.slane %v1720, 4
    %v1722 = vmax.f32 %v1720, %v1721
    %v1723 = vrot.slane %v1722, 2
    %v1724 = vmax.f32 %v1722, %v1723
    %v1725 = vrot.slane %v1724, 1
    %v1726 = vmax.f32 %v1724, %v1725
    %v1727 = vmax.f32 %v1696, %v1697
    %v1728 = vrot.slane %v1727, 4
    %v1729 = vmax.f32 %v1727, %v1728
    %v1730 = vrot.slane %v1729, 2
    %v1731 = vmax.f32 %v1729, %v1730
    %v1732 = vrot.slane %v1731, 1
    %v1733 = vmax.f32 %v1731, %v1732
    %v1734 = vmax.f32 %v1698, %v1699
    %v1735 = vrot.slane %v1734, 4
    %v1736 = vmax.f32 %v1734, %v1735
    %v1737 = vrot.slane %v1736, 2
    %v1738 = vmax.f32 %v1736, %v1737
    %v1739 = vrot.slane %v1738, 1
    %v1740 = vmax.f32 %v1738, %v1739
    %v1741 = vmax.f32 %v1700, %v1701
    %v1742 = vrot.slane %v1741, 4
    %v1743 = vmax.f32 %v1741, %v1742
    %v1744 = vrot.slane %v1743, 2
    %v1745 = vmax.f32 %v1743, %v1744
    %v1746 = vrot.slane %v1745, 1
    %v1747 = vmax.f32 %v1745, %v1746
    %v1748 = vmax.f32 %v1702, %v1703
    %v1749 = vrot.slane %v1748, 4
    %v1750 = vmax.f32 %v1748, %v1749
    %v1751 = vrot.slane %v1750, 2
    %v1752 = vmax.f32 %v1750, %v1751
    %v1753 = vrot.slane %v1752, 1
    %v1754 = vmax.f32 %v1752, %v1753
    %v1755 = vmax.f32 %v1704, %v1705
    %v1756 = vrot.slane %v1755, 4
    %v1757 = vmax.f32 %v1755, %v1756
    %v1758 = vrot.slane %v1757, 2
    %v1759 = vmax.f32 %v1757, %v1758
    %v1760 = vrot.slane %v1759, 1
    %v1761 = vmax.f32 %v1759, %v1760
    %v1762 = vadd.f32 %v48, %v256
    %v1763 = vadd.f32 %v55, %v263
    %v1764 = vadd.f32 %v62, %v270
    %v1765 = vadd.f32 %v69, %v277
    %v1766 = vadd.f32 %v76, %v284
    %v1767 = vadd.f32 %v83, %v291
    %v1768 = vadd.f32 %v90, %v298
    %v1769 = vadd.f32 %v97, %v305
    %v1770 = vadd.f32 %v1762, %v464
    %v1771 = vadd.f32 %v1763, %v471
    %v1772 = vadd.f32 %v1764, %v478
    %v1773 = vadd.f32 %v1765, %v485
    %v1774 = vadd.f32 %v1766, %v492
    %v1775 = vadd.f32 %v1767, %v499
    %v1776 = vadd.f32 %v1768, %v506
    %v1777 = vadd.f32 %v1769, %v513
    %v1778 = vadd.f32 %v1770, %v672
    %v1779 = vadd.f32 %v1771, %v679
    %v1780 = vadd.f32 %v1772, %v686
    %v1781 = vadd.f32 %v1773, %v693
    %v1782 = vadd.f32 %v1774, %v700
    %v1783 = vadd.f32 %v1775, %v707
    %v1784 = vadd.f32 %v1776, %v714
    %v1785 = vadd.f32 %v1777, %v721
    %v1786 = vadd.f32 %v1778, %v880
    %v1787 = vadd.f32 %v1779, %v887
    %v1788 = vadd.f32 %v1780, %v894
    %v1789 = vadd.f32 %v1781, %v901
    %v1790 = vadd.f32 %v1782, %v908
    %v1791 = vadd.f32 %v1783, %v915
    %v1792 = vadd.f32 %v1784, %v922
    %v1793 = vadd.f32 %v1785, %v929
    %v1794 = vadd.f32 %v1786, %v1088
    %v1795 = vadd.f32 %v1787, %v1095
    %v1796 = vadd.f32 %v1788, %v1102
    %v1797 = vadd.f32 %v1789, %v1109
    %v1798 = vadd.f32 %v1790, %v1116
    %v1799 = vadd.f32 %v1791, %v1123
    %v1800 = vadd.f32 %v1792, %v1130
    %v1801 = vadd.f32 %v1793, %v1137
    %v1802 = vadd.f32 %v1794, %v1296
    %v1803 = vadd.f32 %v1795, %v1303
    %v1804 = vadd.f32 %v1796, %v1310
    %v1805 = vadd.f32 %v1797, %v1317
    %v1806 = vadd.f32 %v1798, %v1324
    %v1807 = vadd.f32 %v1799, %v1331
    %v1808 = vadd.f32 %v1800, %v1338
    %v1809 = vadd.f32 %v1801, %v1345
    %v1810 = vadd.f32 %v1802, %v1504
    %v1811 = vadd.f32 %v1803, %v1511
    %v1812 = vadd.f32 %v1804, %v1518
    %v1813 = vadd.f32 %v1805, %v1525
    %v1814 = vadd.f32 %v1806, %v1532
    %v1815 = vadd.f32 %v1807, %v1539
    %v1816 = vadd.f32 %v1808, %v1546
    %v1817 = vadd.f32 %v1809, %v1553
    %v1818 = vadd.f32 %v1810, %v1712
    %v1819 = vadd.f32 %v1811, %v1719
    %v1820 = vadd.f32 %v1812, %v1726
    %v1821 = vadd.f32 %v1813, %v1733
    %v1822 = vadd.f32 %v1814, %v1740
    %v1823 = vadd.f32 %v1815, %v1747
    %v1824 = vadd.f32 %v1816, %v1754
    %v1825 = vadd.f32 %v1817, %v1761
    %v1826 = vmul.f32 %v1818, 0.11111111
    %v1827 = vmul.f32 %v1819, 0.11111111
    %v1828 = vmul.f32 %v1820, 0.11111111
    %v1829 = vmul.f32 %v1821, 0.11111111
    %v1830 = vmul.f32 %v1822, 0.11111111
    %v1831 = vmul.f32 %v1823, 0.11111111
    %v1832 = vmul.f32 %v1824, 0.11111111
    %v1833 = vmul.f32 %v1825, 0.11111111
    %vm1842 = vcmask 1041409
    %v1843 = vsel %vm1842, %v1827, %v1826
    %vm1844 = vcmask 1042434
    %v1845 = vsel %vm1844, %v1828, %v1843
    %vm1846 = vcmask 1043459
    %v1847 = vsel %vm1846, %v1829, %v1845
    %vm1848 = vcmask 1044484
    %v1849 = vsel %vm1848, %v1830, %v1847
    %vm1850 = vcmask 1045509
    %v1851 = vsel %vm1850, %v1831, %v1849
    %vm1852 = vcmask 1046534
    %v1853 = vsel %vm1852, %v1832, %v1851
    %vm1854 = vcmask 1047559
    %v1855 = vsel %vm1854, %v1833, %v1853
    %1857 = vst [vmem:[#allocation5] sm:$0xff] %v1855
    // Predicated region
    $region10: #{tpu_custom_call.1} parent=1 // pred_check
      _
    $region11: #{tpu_custom_call.1} parent=1 // pred_check_branch
      %1859 = sbr.rel (0) target = $region13
    $region12: #{tpu_custom_call.1} parent=1 // pred_region
      %s1861 = ssub.s32 128, 128
      %1862 = vsyncadd [#allocation4], %s1861
      %s1864 = sshll.u32 [#allocation5], 4
      %s1865 = int_to_ptr.vmem [resolvable:$true] %s1864
      %1867 = dma.vmem_to_hbm [thread:$0]  %s1865, 128, %s1, [#allocation4]
    $region13: #{tpu_custom_call.1} parent=1 // pred_fallthru
      _
    // Predicated region
    $region14: #{tpu_custom_call.1} parent=1 // pred_check
      _
    $region15: #{tpu_custom_call.1} parent=1 // pred_check_branch
      %1869 = sbr.rel (0) target = $region17
    $region16: #{tpu_custom_call.1} parent=1 // pred_region
      %1870 = dma.done [#allocation4], 128
    $region17: #{tpu_custom_call.1} parent=1 // pred_fallthru
      _
    %1871 = vsyncpa [#allocation3], 1
    %1872 = vsyncpa [#allocation4], 1

</llo_original>
